<compile_context>
chip_gen: v5e
topology: v5e:2x2
jax: 0.10.0
libtpu: 0.0.40
codegen_flags: <defaults>
</compile_context>

<pallas_src>
import jax
import jax.numpy as jnp
from jax.experimental import pallas as pl
from jax.experimental.pallas import tpu as pltpu


_SUB = 128  # MXU/vreg-native sub-slab row count


# ----------------------------------------------------------------------------
# Pallas kernel: VQ nearest-neighbor + embedding lookup + positional add
# ----------------------------------------------------------------------------
def vq_embed_kernel(tokens_ref, vq_wt_ref, vq_sq_ref, emb_hi_ref, emb_lo_ref,
                    pe_ref, out_ref, idx_ref):
    # tokens_ref : (TM, K)              bf16  token rows for this tile
    # vq_wt_ref  : (K, E)               bf16  VQ codebook, transposed & padded
    # vq_sq_ref  : (1, E)               f32   0.5*||e||^2 per codeword (pad=1e30)
    # emb_hi_ref : (E, D)               bf16  hi half of nn.Embedding weight
    # emb_lo_ref : (E, D)               bf16  lo half (f32 - hi) of the weight
    # pe_ref     : (TM, D)              f32   positional-encoding rows for tile
    # out_ref    : (TM, D)              f32
    # idx_ref    : (1, TM//128, 8, 128) i32   lane-dense indices (8-sublane
    #              broadcast -> unmasked (8,128) vst; unpacked in the wrapper)
    tile_m, _ = tokens_ref.shape
    e = vq_wt_ref.shape[1]
    n_sub = tile_m // _SUB

    # loop-invariant; hoisted out of the loop (JAX does not CSE broadcasts)
    col_ids = jax.lax.broadcasted_iota(jnp.int32, (_SUB, e), 1)

    def body(j, carry):
        r0 = pl.multiple_of(j * _SUB, _SUB)
        x = tokens_ref[pl.ds(r0, _SUB), :]                          # (128,K) bf16

        # nearest codeword: argmin ||x-e||^2 == argmin (0.5*||e||^2 - x.e)
        # (per-row ||x||^2 constant and the global 2x scale are dropped)
        xw = jnp.dot(x, vq_wt_ref[...], preferred_element_type=jnp.float32)
        scores = vq_sq_ref[...] - xw                                # (128,E) f32
        idx = jnp.argmin(scores, axis=-1).astype(jnp.int32)         # (128,)
        idx_ref[0, j] = jnp.broadcast_to(idx[None, :], (8, _SUB))   # lane-dense

        # embedding lookup as one-hot matmul on the bf16 MXU path (0/1 exact);
        # hi + lo bf16 halves reconstruct the f32 embedding rows to ~1e-7.
        onehot = (col_ids == idx[:, None]).astype(jnp.bfloat16)     # (128,E)
        emb = jnp.dot(onehot, emb_hi_ref[...],
                      preferred_element_type=jnp.float32)
        emb = emb + jnp.dot(onehot, emb_lo_ref[...],
                            preferred_element_type=jnp.float32)     # (128,D)

        out_ref[pl.ds(r0, _SUB), :] = (
            emb + pe_ref[pl.ds(r0, _SUB), :]).astype(out_ref.dtype)
        return carry

    jax.lax.fori_loop(0, n_sub, body, 0, unroll=True)


def vq_embed_pallas(tokens, vq_w, emb_w, pe, *, tile_m=512):
    """tokens: (B, N, K) f32, vq_w: (E, K) f32, emb_w: (E, D) f32, pe: (N, D).

    Returns encodings (B, N, D) f32 and VQ indices (B, N) int32.
    """
    B, N, K = tokens.shape
    E, D = emb_w.shape

    n_pad = ((N + _SUB - 1) // _SUB) * _SUB
    # Largest 128-multiple tile that divides the padded per-sequence length
    # (tiles never straddle a batch boundary so pe can be indexed with a
    # simple modulo), preferring >= 2 grid steps so v7x's 2 TCs both work.
    candidates = [c for c in range(_SUB, min(tile_m, n_pad) + 1, _SUB)
                  if n_pad % c == 0]
    multi_step = [c for c in candidates if B * (n_pad // c) >= 2]
    tm = max(multi_step) if multi_step else max(candidates)
    tiles_per_seq = n_pad // tm
    n_tiles = B * tiles_per_seq
    m_pad = B * n_pad
    n_sub = tm // _SUB

    e_pad = max(((E + 127) // 128) * 128, 128)

    # bf16 inputs for the distance matmul (MXU-native on all generations).
    # TODO(synk): for long waveforms, frame inside the kernel from a (B, T)
    # waveform block instead of materializing the (K/stride)x-duplicated
    # im2col tokens (dominant HBM cost on v5e).
    tokens_p = (jnp.pad(tokens, ((0, 0), (0, n_pad - N), (0, 0)))
                .astype(jnp.bfloat16).reshape(m_pad, K))
    pe_p = jnp.pad(pe, ((0, n_pad - N), (0, 0))).astype(jnp.float32)
    vq_wt = jnp.pad(vq_w, ((0, e_pad - E), (0, 0))).T.astype(jnp.bfloat16)
    # 0.5*||e||^2 (the -2 scale folded in); padded codewords get +1e30 sentinel.
    vq_sq = jnp.pad(0.5 * jnp.sum(vq_w * vq_w, axis=-1), (0, e_pad - E),
                    constant_values=1e30)[None, :].astype(jnp.float32)
    emb_w_p = jnp.pad(emb_w, ((0, e_pad - E), (0, 0))).astype(jnp.float32)
    emb_hi = emb_w_p.astype(jnp.bfloat16)
    emb_lo = (emb_w_p - emb_hi.astype(jnp.float32)).astype(jnp.bfloat16)

    # Constant-index weight blocks: single-buffered (their block index never
    # changes across the grid, so double-buffering would only double VMEM).
    # TODO(synk): for production codebooks (large E/D) tile the E axis as a
    # trailing "arbitrary" grid dim with a running (min, argmin) accumulator.
    def weight_spec(shape):
        return pl.BlockSpec(shape, lambda m: (0, 0),
                            pipeline_mode=pl.Buffered(1))

    out, idx8 = pl.pallas_call(
        vq_embed_kernel,
        out_shape=(
            jax.ShapeDtypeStruct((m_pad, D), jnp.float32),
            jax.ShapeDtypeStruct((n_tiles, n_sub, 8, _SUB), jnp.int32),
        ),
        grid_spec=pltpu.PrefetchScalarGridSpec(
            num_scalar_prefetch=0,
            grid=(n_tiles,),
            in_specs=[
                pl.BlockSpec((tm, K), lambda m: (m, 0)),
                weight_spec((K, e_pad)),
                weight_spec((1, e_pad)),
                weight_spec((e_pad, D)),
                weight_spec((e_pad, D)),
                # pe is shared across the batch: indexed only by the position
                # within the sequence, so no (B*N, D) tiled copy through HBM.
                pl.BlockSpec((tm, D), lambda m: (m % tiles_per_seq, 0)),
            ],
            out_specs=[
                pl.BlockSpec((tm, D), lambda m: (m, 0)),
                pl.BlockSpec((1, n_sub, 8, _SUB), lambda m: (m, 0, 0, 0)),
            ],
        ),
        compiler_params=pltpu.CompilerParams(
            dimension_semantics=("parallel",),
            vmem_limit_bytes=32 * 1024 * 1024),
    )(tokens_p, vq_wt, vq_sq, emb_hi, emb_lo, pe_p)

    encodings = out.reshape(B, n_pad, D)[:, :N, :]
    indices = idx8[:, :, 0, :].reshape(B, n_pad)[:, :N]
    return encodings, indices


# ----------------------------------------------------------------------------
# AudioVQEncoder (forward only) — JAX wrapper around the Pallas kernel
# ----------------------------------------------------------------------------
class AudioVQEncoderPallas:
    def __init__(self, in_channels, num_embeddings, embedding_dim,
                 kernel_size, stride, sample_rate=16000,
                 num_tokens_per_second=64, max_num_tokens=768,
                 positional_encoding_type="sample", seed=0, tile_m=512):
        self.in_channels = in_channels
        self.num_embeddings = num_embeddings
        self.embedding_dim = embedding_dim
        # the PyTorch module overrides: self.kernel_size = embedding_dim
        self.kernel_size = embedding_dim
        self.stride = stride
        self.max_num_tokens = max_num_tokens
        self.positional_encoding_type = positional_encoding_type
        self.codebook_size = num_embeddings     # codebook_type == 'wave'
        self.tile_m = tile_m

        k0, k1 = jax.random.split(jax.random.PRNGKey(seed))
        # VectorQuantizer codebook (E, D): uniform(-1/E, 1/E)
        self.vq_weight = jax.random.uniform(
            k0, (num_embeddings, embedding_dim), jnp.float32,
            minval=-1.0 / num_embeddings, maxval=1.0 / num_embeddings)
        # nn.Embedding(codebook_size, embedding_dim).uniform_(-1/E, 1/E)
        self.emb_weight = jax.random.uniform(
            k1, (self.codebook_size, embedding_dim), jnp.float32,
            minval=-1.0 / num_embeddings, maxval=1.0 / num_embeddings)
        # positional_encoding_mesh: t = 1 / 10000 ** (2*i / d)
        i = jnp.arange(embedding_dim // 2, dtype=jnp.float32)
        self.pe_mesh = (1.0 / 10000.0 ** (2.0 * i / embedding_dim))[None, :]

    # --- glue: SpeechSegmentSelector approximated as strided framing -------
    def tokenize(self, x):
        # x: (B, C, T) -> tokens (B, N, K)
        B, C, T = x.shape
        xm = jnp.mean(x, axis=1)                                   # (B, T)
        n_tokens = min(self.max_num_tokens,
                       (T - self.kernel_size) // self.stride + 1)
        starts = jnp.arange(n_tokens) * self.stride                # (N,)
        gather_idx = starts[:, None] + jnp.arange(self.kernel_size)[None, :]
        tokens = xm[:, gather_idx]                                 # (B, N, K)
        return tokens

    def positional_encoding(self, num_tokens):
        if self.positional_encoding_type is None:
            return jnp.zeros((num_tokens, self.embedding_dim), jnp.float32)
        pos = jnp.arange(num_tokens, dtype=jnp.float32)[:, None]
        if self.positional_encoding_type == "sample":
            pos = pos * self.stride
        ang = pos * self.pe_mesh                                   # (N, D/2)
        # rearrange(stack([sin, cos], dim=1), 'p c d -> p (d c)')
        pe = jnp.stack([jnp.sin(ang), jnp.cos(ang)], axis=-1)      # (N, D/2, 2)
        return pe.reshape(num_tokens, self.embedding_dim)

    def __call__(self, x):
        tokens = self.tokenize(x)                                  # (B, N, K)
        N = tokens.shape[1]
        pe = self.positional_encoding(N)                           # (N, D)
        encodings, indices = vq_embed_pallas(
            tokens, self.vq_weight, self.emb_weight, pe, tile_m=self.tile_m)
        return encodings, indices


# ----------------------------------------------------------------------------
def _reference(model, x):
    """Pure-JAX reference of the same forward pass (for a sanity check)."""
    tokens = model.tokenize(x)
    B, N, K = tokens.shape
    flat = tokens.reshape(B * N, K)
    # index path mirrors the kernel's bf16 MXU inputs (near-tie codewords can
    # deviate from a pure-f32 argmin — see correctness note at the top); the
    # embedding lookup is the exact f32 table so it checks the hi/lo split.
    xw = jnp.dot(flat.astype(jnp.bfloat16),
                 model.vq_weight.T.astype(jnp.bfloat16),
                 preferred_element_type=jnp.float32)
    scores = 0.5 * jnp.sum(model.vq_weight * model.vq_weight, -1)[None, :] - xw
    idx = jnp.argmin(scores, axis=-1)
    emb = model.emb_weight[idx]                                    # exact f32
    pe = model.positional_encoding(N)
    enc = emb.reshape(B, N, -1) + pe[None, :, :]
    return enc, idx.reshape(B, N)


if __name__ == "__main__":
    # small shapes: batch=2, channels=1, kernel_size=embedding_dim=128,
    # stride=32 -> 256 tokens per sequence (one 256-row tile per batch)
    B, C = 2, 1
    K = D = 128
    STRIDE = 32
    N = 256
    T = STRIDE * (N - 1) + K            # 8288 samples

    model = AudioVQEncoderPallas(
        in_channels=C, num_embeddings=32, embedding_dim=D,
        kernel_size=K, stride=STRIDE, max_num_tokens=768, seed=0, tile_m=512)

    x = jax.random.normal(jax.random.PRNGKey(0), (B, C, T), jnp.float32)

    enc, idx = model(x)
    enc = jax.block_until_ready(enc)
    idx = jax.block_until_ready(idx)

    ref_enc, ref_idx = _reference(model, x)
    assert enc.shape == (B, N, D), enc.shape
    assert idx.shape == (B, N), idx.shape
    assert jnp.array_equal(idx, ref_idx), "VQ indices mismatch"
    assert jnp.allclose(enc, ref_enc, atol=1e-5, rtol=1e-5), "encoding mismatch"

    print("KERNEL_OK")
</pallas_src>

<mosaic_0001>
module attributes {stable_mosaic.version = 11 : i64} {
  func.func @vq_embed_kernel(%arg0: i32, %arg1: memref<256x128xbf16, #tpu.memory_space<vmem>>, %arg2: memref<128x128xbf16, #tpu.memory_space<vmem>>, %arg3: memref<1x128xf32, #tpu.memory_space<vmem>>, %arg4: memref<128x128xbf16, #tpu.memory_space<vmem>>, %arg5: memref<128x128xbf16, #tpu.memory_space<vmem>>, %arg6: memref<256x128xf32, #tpu.memory_space<vmem>>, %arg7: memref<256x128xf32, #tpu.memory_space<vmem>>, %arg8: memref<1x2x8x128xi32, #tpu.memory_space<vmem>>) attributes {dimension_semantics = [#tpu.dimension_semantics<parallel>], iteration_bounds = array<i64: 2>, scalar_prefetch = 0 : i64, scratch_operands = 0 : i64, tpu.core_type = #tpu.core_type<tc>, window_params = [{transform_indices = @transform_0, window_bounds = array<i64: 256, 128>}, {pipeline_mode = #tpu.pipeline_mode<synchronous>, transform_indices = @transform_1, window_bounds = array<i64: 128, 128>}, {pipeline_mode = #tpu.pipeline_mode<synchronous>, transform_indices = @transform_2, window_bounds = array<i64: 1, 128>}, {pipeline_mode = #tpu.pipeline_mode<synchronous>, transform_indices = @transform_3, window_bounds = array<i64: 128, 128>}, {pipeline_mode = #tpu.pipeline_mode<synchronous>, transform_indices = @transform_4, window_bounds = array<i64: 128, 128>}, {transform_indices = @transform_5, window_bounds = array<i64: 256, 128>}, {transform_indices = @transform_6, window_bounds = array<i64: 256, 128>}, {transform_indices = @transform_7, window_bounds = array<i64: 1, 2, 8, 128>}]} {
    %0 = tpu.iota {dimensions = array<i32: 1>} : vector<128x128xi32>
    %c0_i32 = arith.constant 0 : i32
    %c128_i32 = arith.constant 128 : i32
    %1 = arith.muli %c0_i32, %c128_i32 : i32
    %2 = tpu.assume_multiple %1, 128 : i32
    %3 = arith.index_cast %2 : i32 to index
    %c0 = arith.constant 0 : index
    %4 = vector.load %arg1[%3, %c0] : memref<256x128xbf16, #tpu.memory_space<vmem>>, vector<128x128xbf16>
    %c0_0 = arith.constant 0 : index
    %c0_1 = arith.constant 0 : index
    %5 = vector.load %arg2[%c0_0, %c0_1] : memref<128x128xbf16, #tpu.memory_space<vmem>>, vector<128x128xbf16>
    %cst = arith.constant dense<0.000000e+00> : vector<128x128xf32>
    %6 = tpu.matmul %4, %5, %cst {dimension_numbers = #tpu.dot_dimension_numbers<[1], [0], [0], [1], [0, 0, 1, 1], [], []>} : vector<128x128xbf16>, vector<128x128xbf16>, vector<128x128xf32> -> vector<128x128xf32>
    %c0_2 = arith.constant 0 : index
    %c0_3 = arith.constant 0 : index
    %7 = vector.load %arg3[%c0_2, %c0_3] : memref<1x128xf32, #tpu.memory_space<vmem>>, vector<1x128xf32>
    %8 = vector.broadcast %7 : vector<1x128xf32> to vector<128x128xf32>
    %9 = arith.subf %8, %6 : vector<128x128xf32>
    %10 = tpu.reduce_index %9 {axis = 1 : i32, kind = #tpu.reduction_kind<arg_min>} : vector<128x128xf32> -> vector<128xi32>
    %11 = vector.shape_cast %10 : vector<128xi32> to vector<1x128xi32>
    %12 = vector.shape_cast %11 : vector<1x128xi32> to vector<1x128xi32>
    %13 = vector.broadcast %12 : vector<1x128xi32> to vector<8x128xi32>
    %c0_4 = arith.constant 0 : index
    %14 = arith.index_cast %c0_i32 : i32 to index
    %c0_5 = arith.constant 0 : index
    %c0_6 = arith.constant 0 : index
    %15 = vector.load %arg8[%c0_4, %14, %c0_5, %c0_6] : memref<1x2x8x128xi32, #tpu.memory_space<vmem>>, vector<1x1x8x128xi32>
    %16 = vector.shape_cast %15 : vector<1x1x8x128xi32> to vector<8x128xi32>
    %17 = vector.shape_cast %13 : vector<8x128xi32> to vector<1x1x8x128xi32>
    tpu.vector_store %arg8[%c0_4, %14, %c0_5, %c0_6], %17 {strides = array<i32>} : memref<1x2x8x128xi32, #tpu.memory_space<vmem>>, vector<1x1x8x128xi32>,
    %18 = vector.shape_cast %10 : vector<128xi32> to vector<128x1xi32>
    %19 = vector.broadcast %18 : vector<128x1xi32> to vector<128x128xi32>
    %20 = arith.cmpi eq, %0, %19 : vector<128x128xi32>
    %21 = arith.extui %20 : vector<128x128xi1> to vector<128x128xi32>
    %22 = arith.sitofp %21 : vector<128x128xi32> to vector<128x128xf32>
    %23 = arith.truncf %22 : vector<128x128xf32> to vector<128x128xbf16>
    %c0_7 = arith.constant 0 : index
    %c0_8 = arith.constant 0 : index
    %24 = vector.load %arg4[%c0_7, %c0_8] : memref<128x128xbf16, #tpu.memory_space<vmem>>, vector<128x128xbf16>
    %cst_9 = arith.constant dense<0.000000e+00> : vector<128x128xf32>
    %25 = tpu.matmul %23, %24, %cst_9 {dimension_numbers = #tpu.dot_dimension_numbers<[1], [0], [0], [1], [0, 0, 1, 1], [], []>} : vector<128x128xbf16>, vector<128x128xbf16>, vector<128x128xf32> -> vector<128x128xf32>
    %c0_10 = arith.constant 0 : index
    %c0_11 = arith.constant 0 : index
    %26 = vector.load %arg5[%c0_10, %c0_11] : memref<128x128xbf16, #tpu.memory_space<vmem>>, vector<128x128xbf16>
    %cst_12 = arith.constant dense<0.000000e+00> : vector<128x128xf32>
    %27 = tpu.matmul %23, %26, %cst_12 {dimension_numbers = #tpu.dot_dimension_numbers<[1], [0], [0], [1], [0, 0, 1, 1], [], []>} : vector<128x128xbf16>, vector<128x128xbf16>, vector<128x128xf32> -> vector<128x128xf32>
    %28 = arith.addf %25, %27 : vector<128x128xf32>
    %29 = arith.index_cast %2 : i32 to index
    %c0_13 = arith.constant 0 : index
    %30 = vector.load %arg6[%29, %c0_13] : memref<256x128xf32, #tpu.memory_space<vmem>>, vector<128x128xf32>
    %31 = arith.addf %28, %30 : vector<128x128xf32>
    %32 = arith.index_cast %2 : i32 to index
    %c0_14 = arith.constant 0 : index
    %33 = vector.load %arg7[%32, %c0_14] : memref<256x128xf32, #tpu.memory_space<vmem>>, vector<128x128xf32>
    tpu.vector_store %arg7[%32, %c0_14], %31 {strides = array<i32>} : memref<256x128xf32, #tpu.memory_space<vmem>>, vector<128x128xf32>,
    %c1_i32 = arith.constant 1 : i32
    %c128_i32_15 = arith.constant 128 : i32
    %34 = arith.muli %c1_i32, %c128_i32_15 : i32
    %35 = tpu.assume_multiple %34, 128 : i32
    %36 = arith.index_cast %35 : i32 to index
    %c0_16 = arith.constant 0 : index
    %37 = vector.load %arg1[%36, %c0_16] : memref<256x128xbf16, #tpu.memory_space<vmem>>, vector<128x128xbf16>
    %c0_17 = arith.constant 0 : index
    %c0_18 = arith.constant 0 : index
    %38 = vector.load %arg2[%c0_17, %c0_18] : memref<128x128xbf16, #tpu.memory_space<vmem>>, vector<128x128xbf16>
    %cst_19 = arith.constant dense<0.000000e+00> : vector<128x128xf32>
    %39 = tpu.matmul %37, %38, %cst_19 {dimension_numbers = #tpu.dot_dimension_numbers<[1], [0], [0], [1], [0, 0, 1, 1], [], []>} : vector<128x128xbf16>, vector<128x128xbf16>, vector<128x128xf32> -> vector<128x128xf32>
    %c0_20 = arith.constant 0 : index
    %c0_21 = arith.constant 0 : index
    %40 = vector.load %arg3[%c0_20, %c0_21] : memref<1x128xf32, #tpu.memory_space<vmem>>, vector<1x128xf32>
    %41 = vector.broadcast %40 : vector<1x128xf32> to vector<128x128xf32>
    %42 = arith.subf %41, %39 : vector<128x128xf32>
    %43 = tpu.reduce_index %42 {axis = 1 : i32, kind = #tpu.reduction_kind<arg_min>} : vector<128x128xf32> -> vector<128xi32>
    %44 = vector.shape_cast %43 : vector<128xi32> to vector<1x128xi32>
    %45 = vector.shape_cast %44 : vector<1x128xi32> to vector<1x128xi32>
    %46 = vector.broadcast %45 : vector<1x128xi32> to vector<8x128xi32>
    %c0_22 = arith.constant 0 : index
    %47 = arith.index_cast %c1_i32 : i32 to index
    %c0_23 = arith.constant 0 : index
    %c0_24 = arith.constant 0 : index
    %48 = vector.load %arg8[%c0_22, %47, %c0_23, %c0_24] : memref<1x2x8x128xi32, #tpu.memory_space<vmem>>, vector<1x1x8x128xi32>
    %49 = vector.shape_cast %48 : vector<1x1x8x128xi32> to vector<8x128xi32>
    %50 = vector.shape_cast %46 : vector<8x128xi32> to vector<1x1x8x128xi32>
    tpu.vector_store %arg8[%c0_22, %47, %c0_23, %c0_24], %50 {strides = array<i32>} : memref<1x2x8x128xi32, #tpu.memory_space<vmem>>, vector<1x1x8x128xi32>,
    %51 = vector.shape_cast %43 : vector<128xi32> to vector<128x1xi32>
    %52 = vector.broadcast %51 : vector<128x1xi32> to vector<128x128xi32>
    %53 = arith.cmpi eq, %0, %52 : vector<128x128xi32>
    %54 = arith.extui %53 : vector<128x128xi1> to vector<128x128xi32>
    %55 = arith.sitofp %54 : vector<128x128xi32> to vector<128x128xf32>
    %56 = arith.truncf %55 : vector<128x128xf32> to vector<128x128xbf16>
    %c0_25 = arith.constant 0 : index
    %c0_26 = arith.constant 0 : index
    %57 = vector.load %arg4[%c0_25, %c0_26] : memref<128x128xbf16, #tpu.memory_space<vmem>>, vector<128x128xbf16>
    %cst_27 = arith.constant dense<0.000000e+00> : vector<128x128xf32>
    %58 = tpu.matmul %56, %57, %cst_27 {dimension_numbers = #tpu.dot_dimension_numbers<[1], [0], [0], [1], [0, 0, 1, 1], [], []>} : vector<128x128xbf16>, vector<128x128xbf16>, vector<128x128xf32> -> vector<128x128xf32>
    %c0_28 = arith.constant 0 : index
    %c0_29 = arith.constant 0 : index
    %59 = vector.load %arg5[%c0_28, %c0_29] : memref<128x128xbf16, #tpu.memory_space<vmem>>, vector<128x128xbf16>
    %cst_30 = arith.constant dense<0.000000e+00> : vector<128x128xf32>
    %60 = tpu.matmul %56, %59, %cst_30 {dimension_numbers = #tpu.dot_dimension_numbers<[1], [0], [0], [1], [0, 0, 1, 1], [], []>} : vector<128x128xbf16>, vector<128x128xbf16>, vector<128x128xf32> -> vector<128x128xf32>
    %61 = arith.addf %58, %60 : vector<128x128xf32>
    %62 = arith.index_cast %35 : i32 to index
    %c0_31 = arith.constant 0 : index
    %63 = vector.load %arg6[%62, %c0_31] : memref<256x128xf32, #tpu.memory_space<vmem>>, vector<128x128xf32>
    %64 = arith.addf %61, %63 : vector<128x128xf32>
    %65 = arith.index_cast %35 : i32 to index
    %c0_32 = arith.constant 0 : index
    %66 = vector.load %arg7[%65, %c0_32] : memref<256x128xf32, #tpu.memory_space<vmem>>, vector<128x128xf32>
    tpu.vector_store %arg7[%65, %c0_32], %64 {strides = array<i32>} : memref<256x128xf32, #tpu.memory_space<vmem>>, vector<128x128xf32>,
    %c2_i32 = arith.constant 2 : i32
    return
  }
  func.func @transform_0(%arg0: i32) -> (i32, i32) {
    %c0_i32 = arith.constant 0 : i32
    %c0_i32_0 = arith.constant 0 : i32
    return %arg0, %c0_i32 : i32, i32
  }
  func.func @transform_1(%arg0: i32) -> (i32, i32) {
    %c0_i32 = arith.constant 0 : i32
    %c0_i32_0 = arith.constant 0 : i32
    %c0_i32_1 = arith.constant 0 : i32
    return %c0_i32, %c0_i32_0 : i32, i32
  }
  func.func @transform_2(%arg0: i32) -> (i32, i32) {
    %c0_i32 = arith.constant 0 : i32
    %c0_i32_0 = arith.constant 0 : i32
    %c0_i32_1 = arith.constant 0 : i32
    return %c0_i32, %c0_i32_0 : i32, i32
  }
  func.func @transform_3(%arg0: i32) -> (i32, i32) {
    %c0_i32 = arith.constant 0 : i32
    %c0_i32_0 = arith.constant 0 : i32
    %c0_i32_1 = arith.constant 0 : i32
    return %c0_i32, %c0_i32_0 : i32, i32
  }
  func.func @transform_4(%arg0: i32) -> (i32, i32) {
    %c0_i32 = arith.constant 0 : i32
    %c0_i32_0 = arith.constant 0 : i32
    %c0_i32_1 = arith.constant 0 : i32
    return %c0_i32, %c0_i32_0 : i32, i32
  }
  func.func @transform_5(%arg0: i32) -> (i32, i32) {
    %c1_i32 = arith.constant 1 : i32
    %c0_i32 = arith.constant 0 : i32
    %0 = arith.cmpi eq, %c1_i32, %c0_i32 : i32
    %c1_i32_0 = arith.constant 1 : i32
    %1 = arith.select %0, %c1_i32_0, %c1_i32 : i32
    %2 = arith.remsi %arg0, %1 : i32
    %c0_i32_1 = arith.constant 0 : i32
    %3 = arith.cmpi ne, %2, %c0_i32_1 : i32
    %c0_i32_2 = arith.constant 0 : i32
    %4 = arith.cmpi slt, %2, %c0_i32_2 : i32
    %c0_i32_3 = arith.constant 0 : i32
    %5 = arith.cmpi slt, %1, %c0_i32_3 : i32
    %6 = arith.xori %4, %5 : i1
    %7 = arith.andi %6, %3 : i1
    %8 = arith.addi %2, %1 : i32
    %9 = arith.select %7, %8, %2 : i32
    %c0_i32_4 = arith.constant 0 : i32
    %c0_i32_5 = arith.constant 0 : i32
    return %9, %c0_i32_4 : i32, i32
  }
  func.func @transform_6(%arg0: i32) -> (i32, i32) {
    %c0_i32 = arith.constant 0 : i32
    %c0_i32_0 = arith.constant 0 : i32
    return %arg0, %c0_i32 : i32, i32
  }
  func.func @transform_7(%arg0: i32) -> (i32, i32, i32, i32) {
    %c0_i32 = arith.constant 0 : i32
    %c0_i32_0 = arith.constant 0 : i32
    %c0_i32_1 = arith.constant 0 : i32
    %c0_i32_2 = arith.constant 0 : i32
    return %arg0, %c0_i32, %c0_i32_0, %c0_i32_1 : i32, i32, i32, i32
  }
}

</mosaic_0001>

<llo_original>
// kernel: tpu_custom_call.1
$region0: #{tpu_custom_call.1}
  #allocation0 [shape = 'u32[]', space=smem, size = 0x4, offset = 0x4, fixed_abs, tag = 'smem constant byte address 0x4 - core index']
  #allocation1 [shape = 'u32[72,128]{1,0:T(1,128)}', space=vmem, size = 0x9000, scoped, tag = 'internal scratch']
  %s0 = inlined_call_operand.hbm [shape: bf16[512,128], index: 0, kind: input, shape index: {}]
  %s1 = inlined_call_operand.hbm [shape: bf16[128,128], index: 1, kind: input, shape index: {}]
  %s2 = inlined_call_operand.vmem [shape: f32[1,128], index: 2, kind: input, shape index: {}]
  %s3 = inlined_call_operand.hbm [shape: bf16[128,128], index: 3, kind: input, shape index: {}]
  %s4 = inlined_call_operand.hbm [shape: bf16[128,128], index: 4, kind: input, shape index: {}]
  %s5 = inlined_call_operand.hbm [shape: f32[256,128], index: 5, kind: input, shape index: {}]
  %s6 = inlined_call_operand.hbm [shape: f32[512,128], index: 6, kind: output, shape index: {0}]
  %s7 = inlined_call_operand.hbm [shape: s32[2,2,8,128], index: 7, kind: output, shape index: {1}]
  %8 = xla_tuple %s6, %s7
  %s9 = sld [smem:[#allocation0]]
  $region85: #{tpu_custom_call.1} parent=0
    _
  %s11 = ssub.s32 1, %s9
  %s12 = scalar_select 0, %s11, %s9
  $region1: #{tpu_custom_call.1} parent=0
    #allocation2 [shape = 'u8[131072]{0}', space=vmem, size = 0x20000, scoped, tag = 'input window, operand 0']
    #allocation3 [shape = 's32[2]{0}', space=sflag, size = 0x8, scoped, tag = 'scoped memory for tpu_custom_call.1']
    #allocation4 [shape = 's32[2]{0}', space=sflag, size = 0x8, scoped, tag = 'scoped memory for tpu_custom_call.1']
    #allocation5 [shape = 'u8[32768]{0}', space=vmem, size = 0x8000, scoped, tag = 'input window, operand 1, single buffered']
    #allocation6 [shape = 's32[1]{0}', space=sflag, size = 0x4, scoped, tag = 'scoped memory for tpu_custom_call.1']
    #allocation7 [shape = 'u8[32768]{0}', space=vmem, size = 0x8000, scoped, tag = 'input window, operand 3, single buffered']
    #allocation8 [shape = 'u8[32768]{0}', space=vmem, size = 0x8000, scoped, tag = 'input window, operand 4, single buffered']
    #allocation9 [shape = 's32[1]{0}', space=sflag, size = 0x4, scoped, tag = 'scoped memory for tpu_custom_call.1']
    #allocation10 [shape = 'u8[131072]{0}', space=vmem, size = 0x20000, scoped, tag = 'input window, operand 5, single buffered']
    #allocation11 [shape = 'u8[262144]{0}', space=vmem, size = 0x40000, scoped, tag = 'output window, operand 0']
    #allocation12 [shape = 'u8[16384]{0}', space=vmem, size = 0x4000, scoped, tag = 'output window, operand 1']
    #allocation13 [shape = 's32[2]{0}', space=sflag, size = 0x8, scoped, tag = 'scoped memory for tpu_custom_call.1']
    %13 = vsyncpa [#allocation3], 0
    %s14 = scalar_lea.sflag [#allocation3], 1
    %15 = vsyncpa %s14, 0
    %16 = vsyncpa [#allocation6], 0
    %17 = vsyncpa [#allocation9], 0
    %18 = vsyncpa [#allocation4], 0
    %s19 = scalar_lea.sflag [#allocation4], 1
    %20 = vsyncpa %s19, 0
    %21 = vsyncpa [#allocation13], 0
    %s22 = scalar_lea.sflag [#allocation13], 1
    %23 = vsyncpa %s22, 0
    loop: start=0, step=1, limit=4
    $region2: #{tpu_custom_call.1} parent=1 // loop_pre_header
      _
    $region3: #{tpu_custom_call.1} parent=1 // loop_header
      %s25 = sphi 0, %s29
      %p26 = scmp.ge.s32.totalorder %s25, 4
      %s35 = sphi 0, %s37
      %s38 = sphi 0, %s35
      %s39 = sphi 0, %s38
      %s55 = sphi 0, %s39
      %s59 = sphi 0, %s59
      %s61 = sphi 0, %s59
      %s62 = sphi 0, %s61
      %s76 = sphi 0, %s62
      %s80 = sphi 0, %s80
      %s82 = sphi 0, %s80
      %s83 = sphi 0, %s82
      %s97 = sphi 0, %s83
      %s101 = sphi 0, %s101
      %s103 = sphi 0, %s101
      %s104 = sphi 0, %s103
      %s118 = sphi 0, %s104
      %s122 = sphi 0, %s122
      %s124 = sphi 0, %s122
      %s125 = sphi 0, %s124
      %s139 = sphi 0, %s125
      %s143 = sphi 0, %s143
      %s145 = sphi 0, %s143
      %s146 = sphi 0, %s145
      %s160 = sphi 0, %s146
      %s166 = sphi 0, %s168
      %s169 = sphi 0, %s166
      %s170 = sphi 0, %s169
      %s186 = sphi 0, %s170
      %s192 = sphi 0, %s194
      %s195 = sphi 0, %s192
      %s196 = sphi 0, %s195
      %s212 = sphi 0, %s196
    $region4: #{tpu_custom_call.1} parent=1 // loop_header_branch
      %28 = sbr.rel (%p26) target = $region8
    $region5: #{tpu_custom_call.1} parent=1 // loop_body
      %s30 = ssub.s32 %s25, 1
      %s31 = ssub.s32 %s25, 2
      %s32 = sadd.s32 %s25, 1
      %s33 = ssub.s32 %s25, %s32
      %p34 = scmp.eq.s32.totalorder %s33, 0
      %s36 = sadd.s32 %s35, 1
      %s37 = scalar_select %p34, %s35, %s36
      %p40 = pneg %p34
      %p41 = scmp.eq.s32.totalorder %s25, 1
      %p42 = por %p40, %p41
      %p43 = scmp.ne.s32.totalorder %s35, %s38
      %p44 = scmp.eq.s32.totalorder %s25, 0
      %p45 = por %p43, %p44
      %p46 = scmp.ne.s32.totalorder %s35, %s38
      %p47 = scmp.eq.s32.totalorder %s30, 1
      %p48 = por %p46, %p47
      %p49 = scmp.ne.s32.totalorder %s38, %s39
      %p50 = scmp.eq.s32.totalorder %s30, 0
      %p51 = por %p49, %p50
      %p52 = scmp.ne.s32.totalorder %s38, %s39
      %p53 = scmp.eq.s32.totalorder %s31, 1
      %p54 = por %p52, %p53
      %p56 = scmp.ne.s32.totalorder %s39, %s55
      %p57 = scmp.eq.s32.totalorder %s31, 0
      %p58 = por %p56, %p57
      %s60 = sadd.s32 %s59, 1
      %p63 = scmp.eq.s32.totalorder %s25, 1
      %p64 = scmp.ne.s32.totalorder %s59, %s61
      %p65 = scmp.eq.s32.totalorder %s25, 0
      %p66 = por %p64, %p65
      %p67 = scmp.ne.s32.totalorder %s59, %s61
      %p68 = scmp.eq.s32.totalorder %s30, 1
      %p69 = por %p67, %p68
      %p70 = scmp.ne.s32.totalorder %s61, %s62
      %p71 = scmp.eq.s32.totalorder %s30, 0
      %p72 = por %p70, %p71
      %p73 = scmp.ne.s32.totalorder %s61, %s62
      %p74 = scmp.eq.s32.totalorder %s31, 1
      %p75 = por %p73, %p74
      %p77 = scmp.ne.s32.totalorder %s62, %s76
      %p78 = scmp.eq.s32.totalorder %s31, 0
      %p79 = por %p77, %p78
      %s81 = sadd.s32 %s80, 1
      %p84 = scmp.eq.s32.totalorder %s25, 1
      %p85 = scmp.ne.s32.totalorder %s80, %s82
      %p86 = scmp.eq.s32.totalorder %s25, 0
      %p87 = por %p85, %p86
      %p88 = scmp.ne.s32.totalorder %s80, %s82
      %p89 = scmp.eq.s32.totalorder %s30, 1
      %p90 = por %p88, %p89
      %p91 = scmp.ne.s32.totalorder %s82, %s83
      %p92 = scmp.eq.s32.totalorder %s30, 0
      %p93 = por %p91, %p92
      %p94 = scmp.ne.s32.totalorder %s82, %s83
      %p95 = scmp.eq.s32.totalorder %s31, 1
      %p96 = por %p94, %p95
      %p98 = scmp.ne.s32.totalorder %s83, %s97
      %p99 = scmp.eq.s32.totalorder %s31, 0
      %p100 = por %p98, %p99
      %s102 = sadd.s32 %s101, 1
      %p105 = scmp.eq.s32.totalorder %s25, 1
      %p106 = scmp.ne.s32.totalorder %s101, %s103
      %p107 = scmp.eq.s32.totalorder %s25, 0
      %p108 = por %p106, %p107
      %p109 = scmp.ne.s32.totalorder %s101, %s103
      %p110 = scmp.eq.s32.totalorder %s30, 1
      %p111 = por %p109, %p110
      %p112 = scmp.ne.s32.totalorder %s103, %s104
      %p113 = scmp.eq.s32.totalorder %s30, 0
      %p114 = por %p112, %p113
      %p115 = scmp.ne.s32.totalorder %s103, %s104
      %p116 = scmp.eq.s32.totalorder %s31, 1
      %p117 = por %p115, %p116
      %p119 = scmp.ne.s32.totalorder %s104, %s118
      %p120 = scmp.eq.s32.totalorder %s31, 0
      %p121 = por %p119, %p120
      %s123 = sadd.s32 %s122, 1
      %p126 = scmp.eq.s32.totalorder %s25, 1
      %p127 = scmp.ne.s32.totalorder %s122, %s124
      %p128 = scmp.eq.s32.totalorder %s25, 0
      %p129 = por %p127, %p128
      %p130 = scmp.ne.s32.totalorder %s122, %s124
      %p131 = scmp.eq.s32.totalorder %s30, 1
      %p132 = por %p130, %p131
      %p133 = scmp.ne.s32.totalorder %s124, %s125
      %p134 = scmp.eq.s32.totalorder %s30, 0
      %p135 = por %p133, %p134
      %p136 = scmp.ne.s32.totalorder %s124, %s125
      %p137 = scmp.eq.s32.totalorder %s31, 1
      %p138 = por %p136, %p137
      %p140 = scmp.ne.s32.totalorder %s125, %s139
      %p141 = scmp.eq.s32.totalorder %s31, 0
      %p142 = por %p140, %p141
      %s144 = sadd.s32 %s143, 1
      %p147 = scmp.eq.s32.totalorder %s25, 1
      %p148 = scmp.ne.s32.totalorder %s143, %s145
      %p149 = scmp.eq.s32.totalorder %s25, 0
      %p150 = por %p148, %p149
      %p151 = scmp.ne.s32.totalorder %s143, %s145
      %p152 = scmp.eq.s32.totalorder %s30, 1
      %p153 = por %p151, %p152
      %p154 = scmp.ne.s32.totalorder %s145, %s146
      %p155 = scmp.eq.s32.totalorder %s30, 0
      %p156 = por %p154, %p155
      %p157 = scmp.ne.s32.totalorder %s145, %s146
      %p158 = scmp.eq.s32.totalorder %s31, 1
      %p159 = por %p157, %p158
      %p161 = scmp.ne.s32.totalorder %s146, %s160
      %p162 = scmp.eq.s32.totalorder %s31, 0
      %p163 = por %p161, %p162
      %s164 = ssub.s32 %s25, %s32
      %p165 = scmp.eq.s32.totalorder %s164, 0
      %s167 = sadd.s32 %s166, 1
      %s168 = scalar_select %p165, %s166, %s167
      %p171 = pneg %p165
      %p172 = scmp.eq.s32.totalorder %s25, 1
      %p173 = por %p171, %p172
      %p174 = scmp.ne.s32.totalorder %s166, %s169
      %p175 = scmp.eq.s32.totalorder %s25, 0
      %p176 = por %p174, %p175
      %p177 = scmp.ne.s32.totalorder %s166, %s169
      %p178 = scmp.eq.s32.totalorder %s30, 1
      %p179 = por %p177, %p178
      %p180 = scmp.ne.s32.totalorder %s169, %s170
      %p181 = scmp.eq.s32.totalorder %s30, 0
      %p182 = por %p180, %p181
      %p183 = scmp.ne.s32.totalorder %s169, %s170
      %p184 = scmp.eq.s32.totalorder %s31, 1
      %p185 = por %p183, %p184
      %p187 = scmp.ne.s32.totalorder %s170, %s186
      %p188 = scmp.eq.s32.totalorder %s31, 0
      %p189 = por %p187, %p188
      %s190 = ssub.s32 %s25, %s32
      %p191 = scmp.eq.s32.totalorder %s190, 0
      %s193 = sadd.s32 %s192, 1
      %s194 = scalar_select %p191, %s192, %s193
      %p197 = pneg %p191
      %p198 = scmp.eq.s32.totalorder %s25, 1
      %p199 = por %p197, %p198
      %p200 = scmp.ne.s32.totalorder %s192, %s195
      %p201 = scmp.eq.s32.totalorder %s25, 0
      %p202 = por %p200, %p201
      %p203 = scmp.ne.s32.totalorder %s192, %s195
      %p204 = scmp.eq.s32.totalorder %s30, 1
      %p205 = por %p203, %p204
      %p206 = scmp.ne.s32.totalorder %s195, %s196
      %p207 = scmp.eq.s32.totalorder %s30, 0
      %p208 = por %p206, %p207
      %p209 = scmp.ne.s32.totalorder %s195, %s196
      %p210 = scmp.eq.s32.totalorder %s31, 1
      %p211 = por %p209, %p210
      %p213 = scmp.ne.s32.totalorder %s196, %s212
      %p214 = scmp.eq.s32.totalorder %s31, 0
      %p215 = por %p213, %p214
      %p216 = scmp.le.s32.totalorder 1, %s25
      %p217 = scmp.lt.s32.totalorder %s25, 3
      %p218 = pnand %p216, %p217
      %p219 = pneg %p218
      // Predicated region
      $region9: #{tpu_custom_call.1} parent=5 // pred_check
        _
      $region10: #{tpu_custom_call.1} parent=5 // pred_check_branch
        %221 = sbr.rel (%p218) target = $region12
      $region11: #{tpu_custom_call.1} parent=5 // pred_region
        %s222 = ssub.s32 %s25, 1
        // Predicated region
        $region13: #{tpu_custom_call.1} parent=11 // pred_check
          %p223 = pneg %p72
        $region14: #{tpu_custom_call.1} parent=11 // pred_check_branch
          %225 = sbr.rel (%p223) target = $region16
        $region15: #{tpu_custom_call.1} parent=11 // pred_region
          %227 = vsyncadd [#allocation6], 0
          %s228 = sshll.u32 %s1, 4
          %s229 = int_to_ptr.hbm [resolvable:$true] %s228
          %s230 = sshll.u32 [#allocation5], 4
          %s231 = int_to_ptr.vmem [resolvable:$true] %s230
          %236 = dma.hbm_to_vmem [thread:$0]  %s229, 1024, %s231, [#allocation6], 64, 64, 4
        $region16: #{tpu_custom_call.1} parent=11 // pred_fallthru
          _
        // Predicated region
        $region17: #{tpu_custom_call.1} parent=11 // pred_check
          %p237 = pneg %p93
        $region18: #{tpu_custom_call.1} parent=11 // pred_check_branch
          %239 = sbr.rel (%p237) target = $region20
        $region19: #{tpu_custom_call.1} parent=11 // pred_region
          _
        $region20: #{tpu_custom_call.1} parent=11 // pred_fallthru
          _
        // Predicated region
        $region21: #{tpu_custom_call.1} parent=11 // pred_check
          %p240 = pneg %p114
        $region22: #{tpu_custom_call.1} parent=11 // pred_check_branch
          %242 = sbr.rel (%p240) target = $region24
        $region23: #{tpu_custom_call.1} parent=11 // pred_region
          %244 = vsyncadd [#allocation6], 0
          %s245 = sshll.u32 %s3, 4
          %s246 = int_to_ptr.hbm [resolvable:$true] %s245
          %s247 = sshll.u32 [#allocation7], 4
          %s248 = int_to_ptr.vmem [resolvable:$true] %s247
          %253 = dma.hbm_to_vmem [thread:$0]  %s246, 1024, %s248, [#allocation6], 64, 64, 4
        $region24: #{tpu_custom_call.1} parent=11 // pred_fallthru
          _
        // Predicated region
        $region25: #{tpu_custom_call.1} parent=11 // pred_check
          %p254 = pneg %p135
        $region26: #{tpu_custom_call.1} parent=11 // pred_check_branch
          %256 = sbr.rel (%p254) target = $region28
        $region27: #{tpu_custom_call.1} parent=11 // pred_region
          %258 = vsyncadd [#allocation9], 0
          %s259 = sshll.u32 %s4, 4
          %s260 = int_to_ptr.hbm [resolvable:$true] %s259
          %s261 = sshll.u32 [#allocation8], 4
          %s262 = int_to_ptr.vmem [resolvable:$true] %s261
          %267 = dma.hbm_to_vmem [thread:$0]  %s260, 1024, %s262, [#allocation9], 64, 64, 4
        $region28: #{tpu_custom_call.1} parent=11 // pred_fallthru
          _
        // Predicated region
        $region29: #{tpu_custom_call.1} parent=11 // pred_check
          %p268 = pneg %p156
        $region30: #{tpu_custom_call.1} parent=11 // pred_check_branch
          %270 = sbr.rel (%p268) target = $region32
        $region31: #{tpu_custom_call.1} parent=11 // pred_region
          %272 = vsyncadd [#allocation9], 0
          %s273 = sshll.u32 %s5, 4
          %s274 = int_to_ptr.hbm [resolvable:$true] %s273
          %s275 = sshll.u32 [#allocation10], 4
          %s276 = int_to_ptr.vmem [resolvable:$true] %s275
          %281 = dma.hbm_to_vmem [thread:$0]  %s274, 4096, %s276, [#allocation9], 128, 128, 8
        $region32: #{tpu_custom_call.1} parent=11 // pred_fallthru
          _
      $region12: #{tpu_custom_call.1} parent=5 // pred_fallthru
        _
      %p282 = scmp.lt.s32.totalorder %s25, 2
      // Predicated region
      $region33: #{tpu_custom_call.1} parent=5 // pred_check
        %p283 = pneg %p282
      $region34: #{tpu_custom_call.1} parent=5 // pred_check_branch
        %285 = sbr.rel (%p283) target = $region36
      $region35: #{tpu_custom_call.1} parent=5 // pred_region
        // Predicated region
        $region37: #{tpu_custom_call.1} parent=35 // pred_check
          %p286 = pneg %p45
        $region38: #{tpu_custom_call.1} parent=35 // pred_check_branch
          %288 = sbr.rel (%p286) target = $region40
        $region39: #{tpu_custom_call.1} parent=35 // pred_region
          %s289 = sand.u32 %s35, 1
          %s290 = scalar_lea.sflag [#allocation3], %s289
          %s291 = sand.u32 %s35, 1
          %s292 = smul.addr %s291, 128
          %s293 = scalar_lea.vmem [#allocation2], %s292
          %s294 = smul.u32 32, %s25
          %296 = vsyncadd %s290, 0
          %s297 = smul.addr %s294, 4
          %s298 = scalar_lea.hbm %s0, %s297
          %s299 = sshll.u32 %s298, 4
          %s300 = int_to_ptr.hbm [resolvable:$true] %s299
          %s301 = sshll.u32 %s293, 4
          %s302 = int_to_ptr.vmem [resolvable:$true] %s301
          %307 = dma.hbm_to_vmem [thread:$0]  %s300, 2048, %s302, %s290, 64, 64, 4
        $region40: #{tpu_custom_call.1} parent=35 // pred_fallthru
          _
      $region36: #{tpu_custom_call.1} parent=5 // pred_fallthru
        _
      %p308 = scmp.le.s32.totalorder 1, %s25
      %p309 = scmp.lt.s32.totalorder %s25, 3
      %p310 = pnand %p308, %p309
      %p311 = pneg %p310
      // Predicated region
      $region41: #{tpu_custom_call.1} parent=5 // pred_check
        _
      $region42: #{tpu_custom_call.1} parent=5 // pred_check_branch
        %313 = sbr.rel (%p310) target = $region44
      $region43: #{tpu_custom_call.1} parent=5 // pred_region
        %s314 = ssub.s32 %s25, 1
        %s315 = sand.u32 %s38, 1
        %s316 = scalar_lea.sflag [#allocation3], %s315
        %s317 = sand.u32 %s38, 1
        %s318 = smul.addr %s317, 128
        %s319 = scalar_lea.vmem [#allocation2], %s318
        // Predicated region
        $region45: #{tpu_custom_call.1} parent=43 // pred_check
          %p320 = pneg %p51
        $region46: #{tpu_custom_call.1} parent=43 // pred_check_branch
          %322 = sbr.rel (%p320) target = $region48
        $region47: #{tpu_custom_call.1} parent=43 // pred_region
          %324 = dma.done %s316, 2048
        $region48: #{tpu_custom_call.1} parent=43 // pred_fallthru
          _
        // Predicated region
        $region49: #{tpu_custom_call.1} parent=43 // pred_check
          %p325 = pneg %p72
        $region50: #{tpu_custom_call.1} parent=43 // pred_check_branch
          %327 = sbr.rel (%p325) target = $region52
        $region51: #{tpu_custom_call.1} parent=43 // pred_region
          %329 = dma.done [#allocation6], 1024
        $region52: #{tpu_custom_call.1} parent=43 // pred_fallthru
          _
        // Predicated region
        $region53: #{tpu_custom_call.1} parent=43 // pred_check
          %p330 = pneg %p114
        $region54: #{tpu_custom_call.1} parent=43 // pred_check_branch
          %332 = sbr.rel (%p330) target = $region56
        $region55: #{tpu_custom_call.1} parent=43 // pred_region
          %334 = dma.done [#allocation6], 1024
        $region56: #{tpu_custom_call.1} parent=43 // pred_fallthru
          _
        // Predicated region
        $region57: #{tpu_custom_call.1} parent=43 // pred_check
          %p335 = pneg %p135
        $region58: #{tpu_custom_call.1} parent=43 // pred_check_branch
          %337 = sbr.rel (%p335) target = $region60
        $region59: #{tpu_custom_call.1} parent=43 // pred_region
          %339 = dma.done [#allocation9], 1024
        $region60: #{tpu_custom_call.1} parent=43 // pred_fallthru
          _
        // Predicated region
        $region61: #{tpu_custom_call.1} parent=43 // pred_check
          %p340 = pneg %p156
        $region62: #{tpu_custom_call.1} parent=43 // pred_check_branch
          %342 = sbr.rel (%p340) target = $region64
        $region63: #{tpu_custom_call.1} parent=43 // pred_region
          %344 = dma.done [#allocation9], 4096
        $region64: #{tpu_custom_call.1} parent=43 // pred_fallthru
          _
        %s345 = sand.u32 %s38, 1
        %s346 = scalar_lea.sflag [#allocation3], %s345
        %s347 = sand.u32 %s38, 1
        %s348 = smul.addr %s347, 128
        %s349 = scalar_lea.vmem [#allocation2], %s348
        %p350 = pneg %p51
        %p351 = pneg %p48
        %p352 = pneg %p72
        %p353 = pneg %p69
        %p354 = pneg %p93
        %p355 = pneg %p90
        %p356 = pneg %p114
        %p357 = pneg %p111
        %p358 = pneg %p135
        %p359 = pneg %p132
        %p360 = pneg %p156
        %p361 = pneg %p153
        %p362 = pneg %p182
        %p363 = pneg %p179
        %s364 = sand.u32 %s169, 1
        %s365 = scalar_lea.sflag [#allocation4], %s364
        %s366 = sand.u32 %s169, 1
        %s367 = smul.addr %s366, 256
        %s368 = scalar_lea.vmem [#allocation11], %s367
        %p369 = pneg %p208
        %p370 = pneg %p205
        %s371 = sand.u32 %s195, 1
        %s372 = scalar_lea.sflag [#allocation13], %s371
        %s373 = sand.u32 %s195, 1
        %s374 = smul.addr %s373, 16
        %s375 = scalar_lea.vmem [#allocation12], %s374
        %s376 = smul.u32 32, %s30
        %s377 = smul.u32 32, %s30
        %v378 = vlaneseq
        %v379 = vand.u32 %v378, 127
        %v380 = vld [vmem:[%s319] sm:$0xf]
        %v381 = vld [vmem:[%s319 + $0x4] sm:$0xf]
        %v382 = vld [vmem:[%s319 + $0x8] sm:$0xf]
        %v383 = vld [vmem:[%s319 + $0xc] sm:$0xf]
        %v384 = vld [vmem:[%s319 + $0x10] sm:$0xf]
        %v385 = vld [vmem:[%s319 + $0x14] sm:$0xf]
        %v386 = vld [vmem:[%s319 + $0x18] sm:$0xf]
        %v387 = vld [vmem:[%s319 + $0x1c] sm:$0xf]
        %v388 = vld [vmem:[%s319 + $0x20] sm:$0xf]
        %v389 = vld [vmem:[%s319 + $0x24] sm:$0xf]
        %v390 = vld [vmem:[%s319 + $0x28] sm:$0xf]
        %v391 = vld [vmem:[%s319 + $0x2c] sm:$0xf]
        %v392 = vld [vmem:[%s319 + $0x30] sm:$0xf]
        %v393 = vld [vmem:[%s319 + $0x34] sm:$0xf]
        %v394 = vld [vmem:[%s319 + $0x38] sm:$0xf]
        %v395 = vld [vmem:[%s319 + $0x3c] sm:$0xf]
        %v396 = vld [vmem:[#allocation5] sm:$0xf]
        %v397 = vld [vmem:[#allocation5 + $0x4] sm:$0xf]
        %v398 = vld [vmem:[#allocation5 + $0x8] sm:$0xf]
        %v399 = vld [vmem:[#allocation5 + $0xc] sm:$0xf]
        %v400 = vld [vmem:[#allocation5 + $0x10] sm:$0xf]
        %v401 = vld [vmem:[#allocation5 + $0x14] sm:$0xf]
        %v402 = vld [vmem:[#allocation5 + $0x18] sm:$0xf]
        %v403 = vld [vmem:[#allocation5 + $0x1c] sm:$0xf]
        %v404 = vld [vmem:[#allocation5 + $0x20] sm:$0xf]
        %v405 = vld [vmem:[#allocation5 + $0x24] sm:$0xf]
        %v406 = vld [vmem:[#allocation5 + $0x28] sm:$0xf]
        %v407 = vld [vmem:[#allocation5 + $0x2c] sm:$0xf]
        %v408 = vld [vmem:[#allocation5 + $0x30] sm:$0xf]
        %v409 = vld [vmem:[#allocation5 + $0x34] sm:$0xf]
        %v410 = vld [vmem:[#allocation5 + $0x38] sm:$0xf]
        %v411 = vld [vmem:[#allocation5 + $0x3c] sm:$0xf]
        %v428 = vunpack.c.l.b16 %v380
        %v429 = vunpack.c.l.b16 %v381
        %v430 = vunpack.c.l.b16 %v382
        %v431 = vunpack.c.l.b16 %v383
        %v432 = vunpack.c.l.b16 %v384
        %v433 = vunpack.c.l.b16 %v385
        %v434 = vunpack.c.l.b16 %v386
        %v435 = vunpack.c.l.b16 %v387
        %v436 = vunpack.c.l.b16 %v388
        %v437 = vunpack.c.l.b16 %v389
        %v438 = vunpack.c.l.b16 %v390
        %v439 = vunpack.c.l.b16 %v391
        %v440 = vunpack.c.l.b16 %v392
        %v441 = vunpack.c.l.b16 %v393
        %v442 = vunpack.c.l.b16 %v394
        %v443 = vunpack.c.l.b16 %v395
        %v444 = vpack.c.b16 %v429, %v428
        %v445 = vpack.c.b16 %v431, %v430
        %v446 = vpack.c.b16 %v433, %v432
        %v447 = vpack.c.b16 %v435, %v434
        %v448 = vpack.c.b16 %v437, %v436
        %v449 = vpack.c.b16 %v439, %v438
        %v450 = vpack.c.b16 %v441, %v440
        %v451 = vpack.c.b16 %v443, %v442
        %v476 = vunpack.c.l.b16 %v396
        %v477 = vunpack.c.l.b16 %v397
        %v478 = vunpack.c.l.b16 %v398
        %v479 = vunpack.c.l.b16 %v399
        %v480 = vunpack.c.l.b16 %v400
        %v481 = vunpack.c.l.b16 %v401
        %v482 = vunpack.c.l.b16 %v402
        %v483 = vunpack.c.l.b16 %v403
        %v484 = vunpack.c.l.b16 %v404
        %v485 = vunpack.c.l.b16 %v405
        %v486 = vunpack.c.l.b16 %v406
        %v487 = vunpack.c.l.b16 %v407
        %v488 = vunpack.c.l.b16 %v408
        %v489 = vunpack.c.l.b16 %v409
        %v490 = vunpack.c.l.b16 %v410
        %v491 = vunpack.c.l.b16 %v411
        %v492 = vpack.c.b16 %v477, %v476
        %v493 = vpack.c.b16 %v479, %v478
        %v494 = vpack.c.b16 %v481, %v480
        %v495 = vpack.c.b16 %v483, %v482
        %v496 = vpack.c.b16 %v485, %v484
        %v497 = vpack.c.b16 %v487, %v486
        %v498 = vpack.c.b16 %v489, %v488
        %v499 = vpack.c.b16 %v491, %v490
        %508 = vmatpush.bf16.msra.mxu0 %v499
        %509 = vmatpush.bf16.msra.mxu0 %v498
        %510 = vmatpush.bf16.msra.mxu0 %v497
        %511 = vmatpush.bf16.msra.mxu0 %v496
        %512 = vmatpush.bf16.msra.mxu0 %v495
        %513 = vmatpush.bf16.msra.mxu0 %v494
        %514 = vmatpush.bf16.msra.mxu0 %v493
        %515 = vmatpush.bf16.msra.mxu0 %v492
        %516 = vmatmul.bf16.gmra.mxu0 %v444
        %v517 = vpop.f32.mrf.mxu0
        %v518 = vadd.f32 0.0, %v517
        %v519 = vpop.f32.mrf.mxu0
        %v520 = vadd.f32 0.0, %v519
        %521 = vmatmul.bf16.gmra.mxu0 %v445
        %v522 = vpop.f32.mrf.mxu0
        %v523 = vadd.f32 0.0, %v522
        %v524 = vpop.f32.mrf.mxu0
        %v525 = vadd.f32 0.0, %v524
        %526 = vmatmul.bf16.gmra.mxu0 %v446
        %v527 = vpop.f32.mrf.mxu0
        %v528 = vadd.f32 0.0, %v527
        %v529 = vpop.f32.mrf.mxu0
        %v530 = vadd.f32 0.0, %v529
        %531 = vmatmul.bf16.gmra.mxu0 %v447
        %v532 = vpop.f32.mrf.mxu0
        %v533 = vadd.f32 0.0, %v532
        %v534 = vpop.f32.mrf.mxu0
        %v535 = vadd.f32 0.0, %v534
        %536 = vmatmul.bf16.gmra.mxu0 %v448
        %v537 = vpop.f32.mrf.mxu0
        %v538 = vadd.f32 0.0, %v537
        %v539 = vpop.f32.mrf.mxu0
        %v540 = vadd.f32 0.0, %v539
        %541 = vmatmul.bf16.gmra.mxu0 %v449
        %v542 = vpop.f32.mrf.mxu0
        %v543 = vadd.f32 0.0, %v542
        %v544 = vpop.f32.mrf.mxu0
        %v545 = vadd.f32 0.0, %v544
        %546 = vmatmul.bf16.gmra.mxu0 %v450
        %v547 = vpop.f32.mrf.mxu0
        %v548 = vadd.f32 0.0, %v547
        %v549 = vpop.f32.mrf.mxu0
        %v550 = vadd.f32 0.0, %v549
        %551 = vmatmul.bf16.gmra.mxu0 %v451
        %v552 = vpop.f32.mrf.mxu0
        %v553 = vadd.f32 0.0, %v552
        %v554 = vpop.f32.mrf.mxu0
        %v555 = vadd.f32 0.0, %v554
        %556 = vdwg.mxu0
        %v557 = vld [vmem:[%s2] sm:$0x1]
        %v559 = vperm.slane %v557, 0
        %v561 = vsub.f32 %v559, %v518
        %v562 = vsub.f32 %v559, %v520
        %v563 = vsub.f32 %v559, %v523
        %v564 = vsub.f32 %v559, %v525
        %v565 = vsub.f32 %v559, %v528
        %v566 = vsub.f32 %v559, %v530
        %v567 = vsub.f32 %v559, %v533
        %v568 = vsub.f32 %v559, %v535
        %v569 = vsub.f32 %v559, %v538
        %v570 = vsub.f32 %v559, %v540
        %v571 = vsub.f32 %v559, %v543
        %v572 = vsub.f32 %v559, %v545
        %v573 = vsub.f32 %v559, %v548
        %v574 = vsub.f32 %v559, %v550
        %v575 = vsub.f32 %v559, %v553
        %v576 = vsub.f32 %v559, %v555
        %577 = vmin.index.xlane.f32.xlu0 %v561
        %v578 = vpop.xlane.xlu0 %577
        %579 = vmin.index.xlane.f32.xlu0 %v562
        %v580 = vpop.xlane.xlu0 %579
        %581 = vmin.index.xlane.f32.xlu0 %v563
        %v582 = vpop.xlane.xlu0 %581
        %583 = vmin.index.xlane.f32.xlu0 %v564
        %v584 = vpop.xlane.xlu0 %583
        %585 = vmin.index.xlane.f32.xlu0 %v565
        %v586 = vpop.xlane.xlu0 %585
        %587 = vmin.index.xlane.f32.xlu0 %v566
        %v588 = vpop.xlane.xlu0 %587
        %589 = vmin.index.xlane.f32.xlu0 %v567
        %v590 = vpop.xlane.xlu0 %589
        %591 = vmin.index.xlane.f32.xlu0 %v568
        %v592 = vpop.xlane.xlu0 %591
        %593 = vmin.index.xlane.f32.xlu0 %v569
        %v594 = vpop.xlane.xlu0 %593
        %595 = vmin.index.xlane.f32.xlu0 %v570
        %v596 = vpop.xlane.xlu0 %595
        %597 = vmin.index.xlane.f32.xlu0 %v571
        %v598 = vpop.xlane.xlu0 %597
        %599 = vmin.index.xlane.f32.xlu0 %v572
        %v600 = vpop.xlane.xlu0 %599
        %601 = vmin.index.xlane.f32.xlu0 %v573
        %v602 = vpop.xlane.xlu0 %601
        %603 = vmin.index.xlane.f32.xlu0 %v574
        %v604 = vpop.xlane.xlu0 %603
        %605 = vmin.index.xlane.f32.xlu0 %v575
        %v606 = vpop.xlane.xlu0 %605
        %607 = vmin.index.xlane.f32.xlu0 %v576
        %v608 = vpop.xlane.xlu0 %607
        %v609 = vperm.slane %v578, %v379
        %v610 = vadd.s32 %v379, 4294967288
        %v611 = vperm.slane %v580, %v610
        %vm612 = vcmask 130112
        %v613 = vsel %vm612, %v611, %v609
        %v614 = vadd.s32 %v379, 4294967280
        %v615 = vperm.slane %v582, %v614
        %vm616 = vcmask 195712
        %v617 = vsel %vm616, %v615, %v613
        %v618 = vadd.s32 %v379, 4294967272
        %v619 = vperm.slane %v584, %v618
        %vm620 = vcmask 261312
        %v621 = vsel %vm620, %v619, %v617
        %v622 = vadd.s32 %v379, 4294967264
        %v623 = vperm.slane %v586, %v622
        %vm624 = vcmask 326912
        %v625 = vsel %vm624, %v623, %v621
        %v626 = vadd.s32 %v379, 4294967256
        %v627 = vperm.slane %v588, %v626
        %vm628 = vcmask 392512
        %v629 = vsel %vm628, %v627, %v625
        %v630 = vadd.s32 %v379, 4294967248
        %v631 = vperm.slane %v590, %v630
        %vm632 = vcmask 458112
        %v633 = vsel %vm632, %v631, %v629
        %v634 = vadd.s32 %v379, 4294967240
        %v635 = vperm.slane %v592, %v634
        %vm636 = vcmask 523712
        %v637 = vsel %vm636, %v635, %v633
        %v638 = vadd.s32 %v379, 4294967232
        %v639 = vperm.slane %v594, %v638
        %vm640 = vcmask 589312
        %v641 = vsel %vm640, %v639, %v637
        %v642 = vadd.s32 %v379, 4294967224
        %v643 = vperm.slane %v596, %v642
        %vm644 = vcmask 654912
        %v645 = vsel %vm644, %v643, %v641
        %v646 = vadd.s32 %v379, 4294967216
        %v647 = vperm.slane %v598, %v646
        %vm648 = vcmask 720512
        %v649 = vsel %vm648, %v647, %v645
        %v650 = vadd.s32 %v379, 4294967208
        %v651 = vperm.slane %v600, %v650
        %vm652 = vcmask 786112
        %v653 = vsel %vm652, %v651, %v649
        %v654 = vadd.s32 %v379, 4294967200
        %v655 = vperm.slane %v602, %v654
        %vm656 = vcmask 851712
        %v657 = vsel %vm656, %v655, %v653
        %v658 = vadd.s32 %v379, 4294967192
        %v659 = vperm.slane %v604, %v658
        %vm660 = vcmask 917312
        %v661 = vsel %vm660, %v659, %v657
        %v662 = vadd.s32 %v379, 4294967184
        %v663 = vperm.slane %v606, %v662
        %vm664 = vcmask 982912
        %v665 = vsel %vm664, %v663, %v661
        %v666 = vadd.s32 %v379, 4294967176
        %v667 = vperm.slane %v608, %v666
        %vm668 = vcmask 1048512
        %v669 = vsel %vm668, %v667, %v665
        %vm670 = vcmask 1042434
        %v671 = vsel %vm670, %v669, %v669
        %vm672 = vcmask 1043459
        %v673 = vsel %vm672, %v669, %v671
        %vm674 = vcmask 1044484
        %v675 = vsel %vm674, %v669, %v673
        %vm676 = vcmask 1045509
        %v677 = vsel %vm676, %v669, %v675
        %vm678 = vcmask 1046534
        %v679 = vsel %vm678, %v669, %v677
        %vm680 = vcmask 1047559
        %v681 = vsel %vm680, %v669, %v679
        %682 = vst [vmem:[%s375] sm:$0xff] %v681
        %vm683 = vcmp.eq.s32.totalorder %v379, %v578
        %vm684 = vcmp.eq.s32.totalorder %v379, %v580
        %vm685 = vcmp.eq.s32.totalorder %v379, %v582
        %vm686 = vcmp.eq.s32.totalorder %v379, %v584
        %vm687 = vcmp.eq.s32.totalorder %v379, %v586
        %vm688 = vcmp.eq.s32.totalorder %v379, %v588
        %vm689 = vcmp.eq.s32.totalorder %v379, %v590
        %vm690 = vcmp.eq.s32.totalorder %v379, %v592
        %vm691 = vcmp.eq.s32.totalorder %v379, %v594
        %vm692 = vcmp.eq.s32.totalorder %v379, %v596
        %vm693 = vcmp.eq.s32.totalorder %v379, %v598
        %vm694 = vcmp.eq.s32.totalorder %v379, %v600
        %vm695 = vcmp.eq.s32.totalorder %v379, %v602
        %vm696 = vcmp.eq.s32.totalorder %v379, %v604
        %vm697 = vcmp.eq.s32.totalorder %v379, %v606
        %vm698 = vcmp.eq.s32.totalorder %v379, %v608
        %v699 = vsel %vm683, 1, 0
        %v700 = vsel %vm684, 1, 0
        %v701 = vsel %vm685, 1, 0
        %v702 = vsel %vm686, 1, 0
        %v703 = vsel %vm687, 1, 0
        %v704 = vsel %vm688, 1, 0
        %v705 = vsel %vm689, 1, 0
        %v706 = vsel %vm690, 1, 0
        %v707 = vsel %vm691, 1, 0
        %v708 = vsel %vm692, 1, 0
        %v709 = vsel %vm693, 1, 0
        %v710 = vsel %vm694, 1, 0
        %v711 = vsel %vm695, 1, 0
        %v712 = vsel %vm696, 1, 0
        %v713 = vsel %vm697, 1, 0
        %v714 = vsel %vm698, 1, 0
        %v715 = vcvt.s32.f32 %v699
        %v716 = vcvt.s32.f32 %v700
        %v717 = vcvt.s32.f32 %v701
        %v718 = vcvt.s32.f32 %v702
        %v719 = vcvt.s32.f32 %v703
        %v720 = vcvt.s32.f32 %v704
        %v721 = vcvt.s32.f32 %v705
        %v722 = vcvt.s32.f32 %v706
        %v723 = vcvt.s32.f32 %v707
        %v724 = vcvt.s32.f32 %v708
        %v725 = vcvt.s32.f32 %v709
        %v726 = vcvt.s32.f32 %v710
        %v727 = vcvt.s32.f32 %v711
        %v728 = vcvt.s32.f32 %v712
        %v729 = vcvt.s32.f32 %v713
        %v730 = vcvt.s32.f32 %v714
        %v731 = vpack.c.bf16 %v716, %v715
        %v732 = vpack.c.bf16 %v718, %v717
        %v733 = vpack.c.bf16 %v720, %v719
        %v734 = vpack.c.bf16 %v722, %v721
        %v735 = vpack.c.bf16 %v724, %v723
        %v736 = vpack.c.bf16 %v726, %v725
        %v737 = vpack.c.bf16 %v728, %v727
        %v738 = vpack.c.bf16 %v730, %v729
        %v739 = vld [vmem:[#allocation7] sm:$0xf]
        %v740 = vld [vmem:[#allocation7 + $0x4] sm:$0xf]
        %v741 = vld [vmem:[#allocation7 + $0x8] sm:$0xf]
        %v742 = vld [vmem:[#allocation7 + $0xc] sm:$0xf]
        %v743 = vld [vmem:[#allocation7 + $0x10] sm:$0xf]
        %v744 = vld [vmem:[#allocation7 + $0x14] sm:$0xf]
        %v745 = vld [vmem:[#allocation7 + $0x18] sm:$0xf]
        %v746 = vld [vmem:[#allocation7 + $0x1c] sm:$0xf]
        %v747 = vld [vmem:[#allocation7 + $0x20] sm:$0xf]
        %v748 = vld [vmem:[#allocation7 + $0x24] sm:$0xf]
        %v749 = vld [vmem:[#allocation7 + $0x28] sm:$0xf]
        %v750 = vld [vmem:[#allocation7 + $0x2c] sm:$0xf]
        %v751 = vld [vmem:[#allocation7 + $0x30] sm:$0xf]
        %v752 = vld [vmem:[#allocation7 + $0x34] sm:$0xf]
        %v753 = vld [vmem:[#allocation7 + $0x38] sm:$0xf]
        %v754 = vld [vmem:[#allocation7 + $0x3c] sm:$0xf]
        %v755 = vld [vmem:[#allocation8] sm:$0xf]
        %v756 = vld [vmem:[#allocation8 + $0x4] sm:$0xf]
        %v757 = vld [vmem:[#allocation8 + $0x8] sm:$0xf]
        %v758 = vld [vmem:[#allocation8 + $0xc] sm:$0xf]
        %v759 = vld [vmem:[#allocation8 + $0x10] sm:$0xf]
        %v760 = vld [vmem:[#allocation8 + $0x14] sm:$0xf]
        %v761 = vld [vmem:[#allocation8 + $0x18] sm:$0xf]
        %v762 = vld [vmem:[#allocation8 + $0x1c] sm:$0xf]
        %v763 = vld [vmem:[#allocation8 + $0x20] sm:$0xf]
        %v764 = vld [vmem:[#allocation8 + $0x24] sm:$0xf]
        %v765 = vld [vmem:[#allocation8 + $0x28] sm:$0xf]
        %v766 = vld [vmem:[#allocation8 + $0x2c] sm:$0xf]
        %v767 = vld [vmem:[#allocation8 + $0x30] sm:$0xf]
        %v768 = vld [vmem:[#allocation8 + $0x34] sm:$0xf]
        %v769 = vld [vmem:[#allocation8 + $0x38] sm:$0xf]
        %v770 = vld [vmem:[#allocation8 + $0x3c] sm:$0xf]
        %v787 = vunpack.c.l.b16 %v755
        %v788 = vunpack.c.l.b16 %v756
        %v789 = vunpack.c.l.b16 %v757
        %v790 = vunpack.c.l.b16 %v758
        %v791 = vunpack.c.l.b16 %v759
        %v792 = vunpack.c.l.b16 %v760
        %v793 = vunpack.c.l.b16 %v761
        %v794 = vunpack.c.l.b16 %v762
        %v795 = vunpack.c.l.b16 %v763
        %v796 = vunpack.c.l.b16 %v764
        %v797 = vunpack.c.l.b16 %v765
        %v798 = vunpack.c.l.b16 %v766
        %v799 = vunpack.c.l.b16 %v767
        %v800 = vunpack.c.l.b16 %v768
        %v801 = vunpack.c.l.b16 %v769
        %v802 = vunpack.c.l.b16 %v770
        %v803 = vpack.c.b16 %v788, %v787
        %v804 = vpack.c.b16 %v790, %v789
        %v805 = vpack.c.b16 %v792, %v791
        %v806 = vpack.c.b16 %v794, %v793
        %v807 = vpack.c.b16 %v796, %v795
        %v808 = vpack.c.b16 %v798, %v797
        %v809 = vpack.c.b16 %v800, %v799
        %v810 = vpack.c.b16 %v802, %v801
        %819 = vmatpush.bf16.msra.mxu0 %v810
        %820 = vmatpush.bf16.msra.mxu0 %v809
        %821 = vmatpush.bf16.msra.mxu0 %v808
        %822 = vmatpush.bf16.msra.mxu0 %v807
        %823 = vmatpush.bf16.msra.mxu0 %v806
        %824 = vmatpush.bf16.msra.mxu0 %v805
        %825 = vmatpush.bf16.msra.mxu0 %v804
        %826 = vmatpush.bf16.msra.mxu0 %v803
        %827 = vmatmul.bf16.gmra.mxu0 %v731
        %v828 = vpop.f32.mrf.mxu0
        %v829 = vadd.f32 0.0, %v828
        %v830 = vpop.f32.mrf.mxu0
        %v831 = vadd.f32 0.0, %v830
        %832 = vmatmul.bf16.gmra.mxu0 %v732
        %v833 = vpop.f32.mrf.mxu0
        %v834 = vadd.f32 0.0, %v833
        %v835 = vpop.f32.mrf.mxu0
        %v836 = vadd.f32 0.0, %v835
        %837 = vmatmul.bf16.gmra.mxu0 %v733
        %v838 = vpop.f32.mrf.mxu0
        %v839 = vadd.f32 0.0, %v838
        %v840 = vpop.f32.mrf.mxu0
        %v841 = vadd.f32 0.0, %v840
        %842 = vmatmul.bf16.gmra.mxu0 %v734
        %v843 = vpop.f32.mrf.mxu0
        %v844 = vadd.f32 0.0, %v843
        %v845 = vpop.f32.mrf.mxu0
        %v846 = vadd.f32 0.0, %v845
        %847 = vmatmul.bf16.gmra.mxu0 %v735
        %v848 = vpop.f32.mrf.mxu0
        %v849 = vadd.f32 0.0, %v848
        %v850 = vpop.f32.mrf.mxu0
        %v851 = vadd.f32 0.0, %v850
        %852 = vmatmul.bf16.gmra.mxu0 %v736
        %v853 = vpop.f32.mrf.mxu0
        %v854 = vadd.f32 0.0, %v853
        %v855 = vpop.f32.mrf.mxu0
        %v856 = vadd.f32 0.0, %v855
        %857 = vmatmul.bf16.gmra.mxu0 %v737
        %v858 = vpop.f32.mrf.mxu0
        %v859 = vadd.f32 0.0, %v858
        %v860 = vpop.f32.mrf.mxu0
        %v861 = vadd.f32 0.0, %v860
        %862 = vmatmul.bf16.gmra.mxu0 %v738
        %v863 = vpop.f32.mrf.mxu0
        %v864 = vadd.f32 0.0, %v863
        %v865 = vpop.f32.mrf.mxu0
        %v866 = vadd.f32 0.0, %v865
        %867 = vdwg.mxu0
        %v884 = vunpack.c.l.b16 %v739
        %v885 = vunpack.c.l.b16 %v740
        %v886 = vunpack.c.l.b16 %v741
        %v887 = vunpack.c.l.b16 %v742
        %v888 = vunpack.c.l.b16 %v743
        %v889 = vunpack.c.l.b16 %v744
        %v890 = vunpack.c.l.b16 %v745
        %v891 = vunpack.c.l.b16 %v746
        %v892 = vunpack.c.l.b16 %v747
        %v893 = vunpack.c.l.b16 %v748
        %v894 = vunpack.c.l.b16 %v749
        %v895 = vunpack.c.l.b16 %v750
        %v896 = vunpack.c.l.b16 %v751
        %v897 = vunpack.c.l.b16 %v752
        %v898 = vunpack.c.l.b16 %v753
        %v899 = vunpack.c.l.b16 %v754
        %v900 = vpack.c.b16 %v885, %v884
        %v901 = vpack.c.b16 %v887, %v886
        %v902 = vpack.c.b16 %v889, %v888
        %v903 = vpack.c.b16 %v891, %v890
        %v904 = vpack.c.b16 %v893, %v892
        %v905 = vpack.c.b16 %v895, %v894
        %v906 = vpack.c.b16 %v897, %v896
        %v907 = vpack.c.b16 %v899, %v898
        %916 = vmatpush.bf16.msra.mxu0 %v907
        %917 = vmatpush.bf16.msra.mxu0 %v906
        %918 = vmatpush.bf16.msra.mxu0 %v905
        %919 = vmatpush.bf16.msra.mxu0 %v904
        %920 = vmatpush.bf16.msra.mxu0 %v903
        %921 = vmatpush.bf16.msra.mxu0 %v902
        %922 = vmatpush.bf16.msra.mxu0 %v901
        %923 = vmatpush.bf16.msra.mxu0 %v900
        %924 = vmatmul.bf16.gmra.mxu0 %v731
        %v925 = vpop.f32.mrf.mxu0
        %v926 = vadd.f32 %v829, %v925
        %v927 = vpop.f32.mrf.mxu0
        %v928 = vadd.f32 %v831, %v927
        %929 = vmatmul.bf16.gmra.mxu0 %v732
        %v930 = vpop.f32.mrf.mxu0
        %v931 = vadd.f32 %v834, %v930
        %v932 = vpop.f32.mrf.mxu0
        %v933 = vadd.f32 %v836, %v932
        %934 = vmatmul.bf16.gmra.mxu0 %v733
        %v935 = vpop.f32.mrf.mxu0
        %v936 = vadd.f32 %v839, %v935
        %v937 = vpop.f32.mrf.mxu0
        %v938 = vadd.f32 %v841, %v937
        %939 = vmatmul.bf16.gmra.mxu0 %v734
        %v940 = vpop.f32.mrf.mxu0
        %v941 = vadd.f32 %v844, %v940
        %v942 = vpop.f32.mrf.mxu0
        %v943 = vadd.f32 %v846, %v942
        %944 = vmatmul.bf16.gmra.mxu0 %v735
        %v945 = vpop.f32.mrf.mxu0
        %v946 = vadd.f32 %v849, %v945
        %v947 = vpop.f32.mrf.mxu0
        %v948 = vadd.f32 %v851, %v947
        %949 = vmatmul.bf16.gmra.mxu0 %v736
        %v950 = vpop.f32.mrf.mxu0
        %v951 = vadd.f32 %v854, %v950
        %v952 = vpop.f32.mrf.mxu0
        %v953 = vadd.f32 %v856, %v952
        %954 = vmatmul.bf16.gmra.mxu0 %v737
        %v955 = vpop.f32.mrf.mxu0
        %v956 = vadd.f32 %v859, %v955
        %v957 = vpop.f32.mrf.mxu0
        %v958 = vadd.f32 %v861, %v957
        %959 = vmatmul.bf16.gmra.mxu0 %v738
        %v960 = vpop.f32.mrf.mxu0
        %v961 = vadd.f32 %v864, %v960
        %v962 = vpop.f32.mrf.mxu0
        %v963 = vadd.f32 %v866, %v962
        %964 = vdwg.mxu0
        %v965 = vld [vmem:[#allocation10] sm:$0xff]
        %v966 = vld [vmem:[#allocation10 + $0x8] sm:$0xff]
        %v967 = vld [vmem:[#allocation10 + $0x10] sm:$0xff]
        %v968 = vld [vmem:[#allocation10 + $0x18] sm:$0xff]
        %v969 = vld [vmem:[#allocation10 + $0x20] sm:$0xff]
        %v970 = vld [vmem:[#allocation10 + $0x28] sm:$0xff]
        %v971 = vld [vmem:[#allocation10 + $0x30] sm:$0xff]
        %v972 = vld [vmem:[#allocation10 + $0x38] sm:$0xff]
        %v973 = vld [vmem:[#allocation10 + $0x40] sm:$0xff]
        %v974 = vld [vmem:[#allocation10 + $0x48] sm:$0xff]
        %v975 = vld [vmem:[#allocation10 + $0x50] sm:$0xff]
        %v976 = vld [vmem:[#allocation10 + $0x58] sm:$0xff]
        %v977 = vld [vmem:[#allocation10 + $0x60] sm:$0xff]
        %v978 = vld [vmem:[#allocation10 + $0x68] sm:$0xff]
        %v979 = vld [vmem:[#allocation10 + $0x70] sm:$0xff]
        %v980 = vld [vmem:[#allocation10 + $0x78] sm:$0xff]
        %v981 = vadd.f32 %v926, %v965
        %v982 = vadd.f32 %v928, %v966
        %v983 = vadd.f32 %v931, %v967
        %v984 = vadd.f32 %v933, %v968
        %v985 = vadd.f32 %v936, %v969
        %v986 = vadd.f32 %v938, %v970
        %v987 = vadd.f32 %v941, %v971
        %v988 = vadd.f32 %v943, %v972
        %v989 = vadd.f32 %v946, %v973
        %v990 = vadd.f32 %v948, %v974
        %v991 = vadd.f32 %v951, %v975
        %v992 = vadd.f32 %v953, %v976
        %v993 = vadd.f32 %v956, %v977
        %v994 = vadd.f32 %v958, %v978
        %v995 = vadd.f32 %v961, %v979
        %v996 = vadd.f32 %v963, %v980
        %997 = vst [vmem:[%s368] sm:$0xff] %v981
        %998 = vst [vmem:[%s368 + $0x8] sm:$0xff] %v982
        %999 = vst [vmem:[%s368 + $0x10] sm:$0xff] %v983
        %1000 = vst [vmem:[%s368 + $0x18] sm:$0xff] %v984
        %1001 = vst [vmem:[%s368 + $0x20] sm:$0xff] %v985
        %1002 = vst [vmem:[%s368 + $0x28] sm:$0xff] %v986
        %1003 = vst [vmem:[%s368 + $0x30] sm:$0xff] %v987
        %1004 = vst [vmem:[%s368 + $0x38] sm:$0xff] %v988
        %1005 = vst [vmem:[%s368 + $0x40] sm:$0xff] %v989
        %1006 = vst [vmem:[%s368 + $0x48] sm:$0xff] %v990
        %1007 = vst [vmem:[%s368 + $0x50] sm:$0xff] %v991
        %1008 = vst [vmem:[%s368 + $0x58] sm:$0xff] %v992
        %1009 = vst [vmem:[%s368 + $0x60] sm:$0xff] %v993
        %1010 = vst [vmem:[%s368 + $0x68] sm:$0xff] %v994
        %1011 = vst [vmem:[%s368 + $0x70] sm:$0xff] %v995
        %1012 = vst [vmem:[%s368 + $0x78] sm:$0xff] %v996
        %s1013 = scalar_lea.vmem %s319, 64 [#allocation2]
        %v1014 = vld [vmem:[%s1013] sm:$0xf]
        %v1015 = vld [vmem:[%s1013 + $0x4] sm:$0xf]
        %v1016 = vld [vmem:[%s1013 + $0x8] sm:$0xf]
        %v1017 = vld [vmem:[%s1013 + $0xc] sm:$0xf]
        %v1018 = vld [vmem:[%s1013 + $0x10] sm:$0xf]
        %v1019 = vld [vmem:[%s1013 + $0x14] sm:$0xf]
        %v1020 = vld [vmem:[%s1013 + $0x18] sm:$0xf]
        %v1021 = vld [vmem:[%s1013 + $0x1c] sm:$0xf]
        %v1022 = vld [vmem:[%s1013 + $0x20] sm:$0xf]
        %v1023 = vld [vmem:[%s1013 + $0x24] sm:$0xf]
        %v1024 = vld [vmem:[%s1013 + $0x28] sm:$0xf]
        %v1025 = vld [vmem:[%s1013 + $0x2c] sm:$0xf]
        %v1026 = vld [vmem:[%s1013 + $0x30] sm:$0xf]
        %v1027 = vld [vmem:[%s1013 + $0x34] sm:$0xf]
        %v1028 = vld [vmem:[%s1013 + $0x38] sm:$0xf]
        %v1029 = vld [vmem:[%s1013 + $0x3c] sm:$0xf]
        %v1030 = vld [vmem:[#allocation5] sm:$0xf]
        %v1031 = vld [vmem:[#allocation5 + $0x4] sm:$0xf]
        %v1032 = vld [vmem:[#allocation5 + $0x8] sm:$0xf]
        %v1033 = vld [vmem:[#allocation5 + $0xc] sm:$0xf]
        %v1034 = vld [vmem:[#allocation5 + $0x10] sm:$0xf]
        %v1035 = vld [vmem:[#allocation5 + $0x14] sm:$0xf]
        %v1036 = vld [vmem:[#allocation5 + $0x18] sm:$0xf]
        %v1037 = vld [vmem:[#allocation5 + $0x1c] sm:$0xf]
        %v1038 = vld [vmem:[#allocation5 + $0x20] sm:$0xf]
        %v1039 = vld [vmem:[#allocation5 + $0x24] sm:$0xf]
        %v1040 = vld [vmem:[#allocation5 + $0x28] sm:$0xf]
        %v1041 = vld [vmem:[#allocation5 + $0x2c] sm:$0xf]
        %v1042 = vld [vmem:[#allocation5 + $0x30] sm:$0xf]
        %v1043 = vld [vmem:[#allocation5 + $0x34] sm:$0xf]
        %v1044 = vld [vmem:[#allocation5 + $0x38] sm:$0xf]
        %v1045 = vld [vmem:[#allocation5 + $0x3c] sm:$0xf]
        %v1062 = vunpack.c.l.b16 %v1014
        %v1063 = vunpack.c.l.b16 %v1015
        %v1064 = vunpack.c.l.b16 %v1016
        %v1065 = vunpack.c.l.b16 %v1017
        %v1066 = vunpack.c.l.b16 %v1018
        %v1067 = vunpack.c.l.b16 %v1019
        %v1068 = vunpack.c.l.b16 %v1020
        %v1069 = vunpack.c.l.b16 %v1021
        %v1070 = vunpack.c.l.b16 %v1022
        %v1071 = vunpack.c.l.b16 %v1023
        %v1072 = vunpack.c.l.b16 %v1024
        %v1073 = vunpack.c.l.b16 %v1025
        %v1074 = vunpack.c.l.b16 %v1026
        %v1075 = vunpack.c.l.b16 %v1027
        %v1076 = vunpack.c.l.b16 %v1028
        %v1077 = vunpack.c.l.b16 %v1029
        %v1078 = vpack.c.b16 %v1063, %v1062
        %v1079 = vpack.c.b16 %v1065, %v1064
        %v1080 = vpack.c.b16 %v1067, %v1066
        %v1081 = vpack.c.b16 %v1069, %v1068
        %v1082 = vpack.c.b16 %v1071, %v1070
        %v1083 = vpack.c.b16 %v1073, %v1072
        %v1084 = vpack.c.b16 %v1075, %v1074
        %v1085 = vpack.c.b16 %v1077, %v1076
        %v1110 = vunpack.c.l.b16 %v1030
        %v1111 = vunpack.c.l.b16 %v1031
        %v1112 = vunpack.c.l.b16 %v1032
        %v1113 = vunpack.c.l.b16 %v1033
        %v1114 = vunpack.c.l.b16 %v1034
        %v1115 = vunpack.c.l.b16 %v1035
        %v1116 = vunpack.c.l.b16 %v1036
        %v1117 = vunpack.c.l.b16 %v1037
        %v1118 = vunpack.c.l.b16 %v1038
        %v1119 = vunpack.c.l.b16 %v1039
        %v1120 = vunpack.c.l.b16 %v1040
        %v1121 = vunpack.c.l.b16 %v1041
        %v1122 = vunpack.c.l.b16 %v1042
        %v1123 = vunpack.c.l.b16 %v1043
        %v1124 = vunpack.c.l.b16 %v1044
        %v1125 = vunpack.c.l.b16 %v1045
        %v1126 = vpack.c.b16 %v1111, %v1110
        %v1127 = vpack.c.b16 %v1113, %v1112
        %v1128 = vpack.c.b16 %v1115, %v1114
        %v1129 = vpack.c.b16 %v1117, %v1116
        %v1130 = vpack.c.b16 %v1119, %v1118
        %v1131 = vpack.c.b16 %v1121, %v1120
        %v1132 = vpack.c.b16 %v1123, %v1122
        %v1133 = vpack.c.b16 %v1125, %v1124
        %1142 = vmatpush.bf16.msra.mxu0 %v1133
        %1143 = vmatpush.bf16.msra.mxu0 %v1132
        %1144 = vmatpush.bf16.msra.mxu0 %v1131
        %1145 = vmatpush.bf16.msra.mxu0 %v1130
        %1146 = vmatpush.bf16.msra.mxu0 %v1129
        %1147 = vmatpush.bf16.msra.mxu0 %v1128
        %1148 = vmatpush.bf16.msra.mxu0 %v1127
        %1149 = vmatpush.bf16.msra.mxu0 %v1126
        %1150 = vmatmul.bf16.gmra.mxu0 %v1078
        %v1151 = vpop.f32.mrf.mxu0
        %v1152 = vadd.f32 0.0, %v1151
        %v1153 = vpop.f32.mrf.mxu0
        %v1154 = vadd.f32 0.0, %v1153
        %1155 = vmatmul.bf16.gmra.mxu0 %v1079
        %v1156 = vpop.f32.mrf.mxu0
        %v1157 = vadd.f32 0.0, %v1156
        %v1158 = vpop.f32.mrf.mxu0
        %v1159 = vadd.f32 0.0, %v1158
        %1160 = vmatmul.bf16.gmra.mxu0 %v1080
        %v1161 = vpop.f32.mrf.mxu0
        %v1162 = vadd.f32 0.0, %v1161
        %v1163 = vpop.f32.mrf.mxu0
        %v1164 = vadd.f32 0.0, %v1163
        %1165 = vmatmul.bf16.gmra.mxu0 %v1081
        %v1166 = vpop.f32.mrf.mxu0
        %v1167 = vadd.f32 0.0, %v1166
        %v1168 = vpop.f32.mrf.mxu0
        %v1169 = vadd.f32 0.0, %v1168
        %1170 = vmatmul.bf16.gmra.mxu0 %v1082
        %v1171 = vpop.f32.mrf.mxu0
        %v1172 = vadd.f32 0.0, %v1171
        %v1173 = vpop.f32.mrf.mxu0
        %v1174 = vadd.f32 0.0, %v1173
        %1175 = vmatmul.bf16.gmra.mxu0 %v1083
        %v1176 = vpop.f32.mrf.mxu0
        %v1177 = vadd.f32 0.0, %v1176
        %v1178 = vpop.f32.mrf.mxu0
        %v1179 = vadd.f32 0.0, %v1178
        %1180 = vmatmul.bf16.gmra.mxu0 %v1084
        %v1181 = vpop.f32.mrf.mxu0
        %v1182 = vadd.f32 0.0, %v1181
        %v1183 = vpop.f32.mrf.mxu0
        %v1184 = vadd.f32 0.0, %v1183
        %1185 = vmatmul.bf16.gmra.mxu0 %v1085
        %v1186 = vpop.f32.mrf.mxu0
        %v1187 = vadd.f32 0.0, %v1186
        %v1188 = vpop.f32.mrf.mxu0
        %v1189 = vadd.f32 0.0, %v1188
        %1190 = vdwg.mxu0
        %v1191 = vld [vmem:[%s2] sm:$0x1]
        %v1193 = vperm.slane %v1191, 0
        %v1195 = vsub.f32 %v1193, %v1152
        %v1196 = vsub.f32 %v1193, %v1154
        %v1197 = vsub.f32 %v1193, %v1157
        %v1198 = vsub.f32 %v1193, %v1159
        %v1199 = vsub.f32 %v1193, %v1162
        %v1200 = vsub.f32 %v1193, %v1164
        %v1201 = vsub.f32 %v1193, %v1167
        %v1202 = vsub.f32 %v1193, %v1169
        %v1203 = vsub.f32 %v1193, %v1172
        %v1204 = vsub.f32 %v1193, %v1174
        %v1205 = vsub.f32 %v1193, %v1177
        %v1206 = vsub.f32 %v1193, %v1179
        %v1207 = vsub.f32 %v1193, %v1182
        %v1208 = vsub.f32 %v1193, %v1184
        %v1209 = vsub.f32 %v1193, %v1187
        %v1210 = vsub.f32 %v1193, %v1189
        %1211 = vmin.index.xlane.f32.xlu0 %v1195
        %v1212 = vpop.xlane.xlu0 %1211
        %1213 = vmin.index.xlane.f32.xlu0 %v1196
        %v1214 = vpop.xlane.xlu0 %1213
        %1215 = vmin.index.xlane.f32.xlu0 %v1197
        %v1216 = vpop.xlane.xlu0 %1215
        %1217 = vmin.index.xlane.f32.xlu0 %v1198
        %v1218 = vpop.xlane.xlu0 %1217
        %1219 = vmin.index.xlane.f32.xlu0 %v1199
        %v1220 = vpop.xlane.xlu0 %1219
        %1221 = vmin.index.xlane.f32.xlu0 %v1200
        %v1222 = vpop.xlane.xlu0 %1221
        %1223 = vmin.index.xlane.f32.xlu0 %v1201
        %v1224 = vpop.xlane.xlu0 %1223
        %1225 = vmin.index.xlane.f32.xlu0 %v1202
        %v1226 = vpop.xlane.xlu0 %1225
        %1227 = vmin.index.xlane.f32.xlu0 %v1203
        %v1228 = vpop.xlane.xlu0 %1227
        %1229 = vmin.index.xlane.f32.xlu0 %v1204
        %v1230 = vpop.xlane.xlu0 %1229
        %1231 = vmin.index.xlane.f32.xlu0 %v1205
        %v1232 = vpop.xlane.xlu0 %1231
        %1233 = vmin.index.xlane.f32.xlu0 %v1206
        %v1234 = vpop.xlane.xlu0 %1233
        %1235 = vmin.index.xlane.f32.xlu0 %v1207
        %v1236 = vpop.xlane.xlu0 %1235
        %1237 = vmin.index.xlane.f32.xlu0 %v1208
        %v1238 = vpop.xlane.xlu0 %1237
        %1239 = vmin.index.xlane.f32.xlu0 %v1209
        %v1240 = vpop.xlane.xlu0 %1239
        %1241 = vmin.index.xlane.f32.xlu0 %v1210
        %v1242 = vpop.xlane.xlu0 %1241
        %v1243 = vperm.slane %v1212, %v379
        %v1244 = vperm.slane %v1214, %v610
        %v1245 = vsel %vm612, %v1244, %v1243
        %v1246 = vperm.slane %v1216, %v614
        %v1247 = vsel %vm616, %v1246, %v1245
        %v1248 = vperm.slane %v1218, %v618
        %v1249 = vsel %vm620, %v1248, %v1247
        %v1250 = vperm.slane %v1220, %v622
        %v1251 = vsel %vm624, %v1250, %v1249
        %v1252 = vperm.slane %v1222, %v626
        %v1253 = vsel %vm628, %v1252, %v1251
        %v1254 = vperm.slane %v1224, %v630
        %v1255 = vsel %vm632, %v1254, %v1253
        %v1256 = vperm.slane %v1226, %v634
        %v1257 = vsel %vm636, %v1256, %v1255
        %v1258 = vperm.slane %v1228, %v638
        %v1259 = vsel %vm640, %v1258, %v1257
        %v1260 = vperm.slane %v1230, %v642
        %v1261 = vsel %vm644, %v1260, %v1259
        %v1262 = vperm.slane %v1232, %v646
        %v1263 = vsel %vm648, %v1262, %v1261
        %v1264 = vperm.slane %v1234, %v650
        %v1265 = vsel %vm652, %v1264, %v1263
        %v1266 = vperm.slane %v1236, %v654
        %v1267 = vsel %vm656, %v1266, %v1265
        %v1268 = vperm.slane %v1238, %v658
        %v1269 = vsel %vm660, %v1268, %v1267
        %v1270 = vperm.slane %v1240, %v662
        %v1271 = vsel %vm664, %v1270, %v1269
        %v1272 = vperm.slane %v1242, %v666
        %v1273 = vsel %vm668, %v1272, %v1271
        %v1274 = vsel %vm670, %v1273, %v1273
        %v1275 = vsel %vm672, %v1273, %v1274
        %v1276 = vsel %vm674, %v1273, %v1275
        %v1277 = vsel %vm676, %v1273, %v1276
        %v1278 = vsel %vm678, %v1273, %v1277
        %v1279 = vsel %vm680, %v1273, %v1278
        %s1280 = scalar_lea.vmem %s375, 8 [#allocation12]
        %1281 = vst [vmem:[%s1280] sm:$0xff] %v1279
        %vm1282 = vcmp.eq.s32.totalorder %v379, %v1212
        %vm1283 = vcmp.eq.s32.totalorder %v379, %v1214
        %vm1284 = vcmp.eq.s32.totalorder %v379, %v1216
        %vm1285 = vcmp.eq.s32.totalorder %v379, %v1218
        %vm1286 = vcmp.eq.s32.totalorder %v379, %v1220
        %vm1287 = vcmp.eq.s32.totalorder %v379, %v1222
        %vm1288 = vcmp.eq.s32.totalorder %v379, %v1224
        %vm1289 = vcmp.eq.s32.totalorder %v379, %v1226
        %vm1290 = vcmp.eq.s32.totalorder %v379, %v1228
        %vm1291 = vcmp.eq.s32.totalorder %v379, %v1230
        %vm1292 = vcmp.eq.s32.totalorder %v379, %v1232
        %vm1293 = vcmp.eq.s32.totalorder %v379, %v1234
        %vm1294 = vcmp.eq.s32.totalorder %v379, %v1236
        %vm1295 = vcmp.eq.s32.totalorder %v379, %v1238
        %vm1296 = vcmp.eq.s32.totalorder %v379, %v1240
        %vm1297 = vcmp.eq.s32.totalorder %v379, %v1242
        %v1298 = vsel %vm1282, 1, 0
        %v1299 = vsel %vm1283, 1, 0
        %v1300 = vsel %vm1284, 1, 0
        %v1301 = vsel %vm1285, 1, 0
        %v1302 = vsel %vm1286, 1, 0
        %v1303 = vsel %vm1287, 1, 0
        %v1304 = vsel %vm1288, 1, 0
        %v1305 = vsel %vm1289, 1, 0
        %v1306 = vsel %vm1290, 1, 0
        %v1307 = vsel %vm1291, 1, 0
        %v1308 = vsel %vm1292, 1, 0
        %v1309 = vsel %vm1293, 1, 0
        %v1310 = vsel %vm1294, 1, 0
        %v1311 = vsel %vm1295, 1, 0
        %v1312 = vsel %vm1296, 1, 0
        %v1313 = vsel %vm1297, 1, 0
        %v1314 = vcvt.s32.f32 %v1298
        %v1315 = vcvt.s32.f32 %v1299
        %v1316 = vcvt.s32.f32 %v1300
        %v1317 = vcvt.s32.f32 %v1301
        %v1318 = vcvt.s32.f32 %v1302
        %v1319 = vcvt.s32.f32 %v1303
        %v1320 = vcvt.s32.f32 %v1304
        %v1321 = vcvt.s32.f32 %v1305
        %v1322 = vcvt.s32.f32 %v1306
        %v1323 = vcvt.s32.f32 %v1307
        %v1324 = vcvt.s32.f32 %v1308
        %v1325 = vcvt.s32.f32 %v1309
        %v1326 = vcvt.s32.f32 %v1310
        %v1327 = vcvt.s32.f32 %v1311
        %v1328 = vcvt.s32.f32 %v1312
        %v1329 = vcvt.s32.f32 %v1313
        %v1330 = vpack.c.bf16 %v1315, %v1314
        %v1331 = vpack.c.bf16 %v1317, %v1316
        %v1332 = vpack.c.bf16 %v1319, %v1318
        %v1333 = vpack.c.bf16 %v1321, %v1320
        %v1334 = vpack.c.bf16 %v1323, %v1322
        %v1335 = vpack.c.bf16 %v1325, %v1324
        %v1336 = vpack.c.bf16 %v1327, %v1326
        %v1337 = vpack.c.bf16 %v1329, %v1328
        %v1338 = vld [vmem:[#allocation7] sm:$0xf]
        %v1339 = vld [vmem:[#allocation7 + $0x4] sm:$0xf]
        %v1340 = vld [vmem:[#allocation7 + $0x8] sm:$0xf]
        %v1341 = vld [vmem:[#allocation7 + $0xc] sm:$0xf]
        %v1342 = vld [vmem:[#allocation7 + $0x10] sm:$0xf]
        %v1343 = vld [vmem:[#allocation7 + $0x14] sm:$0xf]
        %v1344 = vld [vmem:[#allocation7 + $0x18] sm:$0xf]
        %v1345 = vld [vmem:[#allocation7 + $0x1c] sm:$0xf]
        %v1346 = vld [vmem:[#allocation7 + $0x20] sm:$0xf]
        %v1347 = vld [vmem:[#allocation7 + $0x24] sm:$0xf]
        %v1348 = vld [vmem:[#allocation7 + $0x28] sm:$0xf]
        %v1349 = vld [vmem:[#allocation7 + $0x2c] sm:$0xf]
        %v1350 = vld [vmem:[#allocation7 + $0x30] sm:$0xf]
        %v1351 = vld [vmem:[#allocation7 + $0x34] sm:$0xf]
        %v1352 = vld [vmem:[#allocation7 + $0x38] sm:$0xf]
        %v1353 = vld [vmem:[#allocation7 + $0x3c] sm:$0xf]
        %v1354 = vld [vmem:[#allocation8] sm:$0xf]
        %v1355 = vld [vmem:[#allocation8 + $0x4] sm:$0xf]
        %v1356 = vld [vmem:[#allocation8 + $0x8] sm:$0xf]
        %v1357 = vld [vmem:[#allocation8 + $0xc] sm:$0xf]
        %v1358 = vld [vmem:[#allocation8 + $0x10] sm:$0xf]
        %v1359 = vld [vmem:[#allocation8 + $0x14] sm:$0xf]
        %v1360 = vld [vmem:[#allocation8 + $0x18] sm:$0xf]
        %v1361 = vld [vmem:[#allocation8 + $0x1c] sm:$0xf]
        %v1362 = vld [vmem:[#allocation8 + $0x20] sm:$0xf]
        %v1363 = vld [vmem:[#allocation8 + $0x24] sm:$0xf]
        %v1364 = vld [vmem:[#allocation8 + $0x28] sm:$0xf]
        %v1365 = vld [vmem:[#allocation8 + $0x2c] sm:$0xf]
        %v1366 = vld [vmem:[#allocation8 + $0x30] sm:$0xf]
        %v1367 = vld [vmem:[#allocation8 + $0x34] sm:$0xf]
        %v1368 = vld [vmem:[#allocation8 + $0x38] sm:$0xf]
        %v1369 = vld [vmem:[#allocation8 + $0x3c] sm:$0xf]
        %v1386 = vunpack.c.l.b16 %v1354
        %v1387 = vunpack.c.l.b16 %v1355
        %v1388 = vunpack.c.l.b16 %v1356
        %v1389 = vunpack.c.l.b16 %v1357
        %v1390 = vunpack.c.l.b16 %v1358
        %v1391 = vunpack.c.l.b16 %v1359
        %v1392 = vunpack.c.l.b16 %v1360
        %v1393 = vunpack.c.l.b16 %v1361
        %v1394 = vunpack.c.l.b16 %v1362
        %v1395 = vunpack.c.l.b16 %v1363
        %v1396 = vunpack.c.l.b16 %v1364
        %v1397 = vunpack.c.l.b16 %v1365
        %v1398 = vunpack.c.l.b16 %v1366
        %v1399 = vunpack.c.l.b16 %v1367
        %v1400 = vunpack.c.l.b16 %v1368
        %v1401 = vunpack.c.l.b16 %v1369
        %v1402 = vpack.c.b16 %v1387, %v1386
        %v1403 = vpack.c.b16 %v1389, %v1388
        %v1404 = vpack.c.b16 %v1391, %v1390
        %v1405 = vpack.c.b16 %v1393, %v1392
        %v1406 = vpack.c.b16 %v1395, %v1394
        %v1407 = vpack.c.b16 %v1397, %v1396
        %v1408 = vpack.c.b16 %v1399, %v1398
        %v1409 = vpack.c.b16 %v1401, %v1400
        %1418 = vmatpush.bf16.msra.mxu0 %v1409
        %1419 = vmatpush.bf16.msra.mxu0 %v1408
        %1420 = vmatpush.bf16.msra.mxu0 %v1407
        %1421 = vmatpush.bf16.msra.mxu0 %v1406
        %1422 = vmatpush.bf16.msra.mxu0 %v1405
        %1423 = vmatpush.bf16.msra.mxu0 %v1404
        %1424 = vmatpush.bf16.msra.mxu0 %v1403
        %1425 = vmatpush.bf16.msra.mxu0 %v1402
        %1426 = vmatmul.bf16.gmra.mxu0 %v1330
        %v1427 = vpop.f32.mrf.mxu0
        %v1428 = vadd.f32 0.0, %v1427
        %v1429 = vpop.f32.mrf.mxu0
        %v1430 = vadd.f32 0.0, %v1429
        %1431 = vmatmul.bf16.gmra.mxu0 %v1331
        %v1432 = vpop.f32.mrf.mxu0
        %v1433 = vadd.f32 0.0, %v1432
        %v1434 = vpop.f32.mrf.mxu0
        %v1435 = vadd.f32 0.0, %v1434
        %1436 = vmatmul.bf16.gmra.mxu0 %v1332
        %v1437 = vpop.f32.mrf.mxu0
        %v1438 = vadd.f32 0.0, %v1437
        %v1439 = vpop.f32.mrf.mxu0
        %v1440 = vadd.f32 0.0, %v1439
        %1441 = vmatmul.bf16.gmra.mxu0 %v1333
        %v1442 = vpop.f32.mrf.mxu0
        %v1443 = vadd.f32 0.0, %v1442
        %v1444 = vpop.f32.mrf.mxu0
        %v1445 = vadd.f32 0.0, %v1444
        %1446 = vmatmul.bf16.gmra.mxu0 %v1334
        %v1447 = vpop.f32.mrf.mxu0
        %v1448 = vadd.f32 0.0, %v1447
        %v1449 = vpop.f32.mrf.mxu0
        %v1450 = vadd.f32 0.0, %v1449
        %1451 = vmatmul.bf16.gmra.mxu0 %v1335
        %v1452 = vpop.f32.mrf.mxu0
        %v1453 = vadd.f32 0.0, %v1452
        %v1454 = vpop.f32.mrf.mxu0
        %v1455 = vadd.f32 0.0, %v1454
        %1456 = vmatmul.bf16.gmra.mxu0 %v1336
        %v1457 = vpop.f32.mrf.mxu0
        %v1458 = vadd.f32 0.0, %v1457
        %v1459 = vpop.f32.mrf.mxu0
        %v1460 = vadd.f32 0.0, %v1459
        %1461 = vmatmul.bf16.gmra.mxu0 %v1337
        %v1462 = vpop.f32.mrf.mxu0
        %v1463 = vadd.f32 0.0, %v1462
        %v1464 = vpop.f32.mrf.mxu0
        %v1465 = vadd.f32 0.0, %v1464
        %1466 = vdwg.mxu0
        %v1483 = vunpack.c.l.b16 %v1338
        %v1484 = vunpack.c.l.b16 %v1339
        %v1485 = vunpack.c.l.b16 %v1340
        %v1486 = vunpack.c.l.b16 %v1341
        %v1487 = vunpack.c.l.b16 %v1342
        %v1488 = vunpack.c.l.b16 %v1343
        %v1489 = vunpack.c.l.b16 %v1344
        %v1490 = vunpack.c.l.b16 %v1345
        %v1491 = vunpack.c.l.b16 %v1346
        %v1492 = vunpack.c.l.b16 %v1347
        %v1493 = vunpack.c.l.b16 %v1348
        %v1494 = vunpack.c.l.b16 %v1349
        %v1495 = vunpack.c.l.b16 %v1350
        %v1496 = vunpack.c.l.b16 %v1351
        %v1497 = vunpack.c.l.b16 %v1352
        %v1498 = vunpack.c.l.b16 %v1353
        %v1499 = vpack.c.b16 %v1484, %v1483
        %v1500 = vpack.c.b16 %v1486, %v1485
        %v1501 = vpack.c.b16 %v1488, %v1487
        %v1502 = vpack.c.b16 %v1490, %v1489
        %v1503 = vpack.c.b16 %v1492, %v1491
        %v1504 = vpack.c.b16 %v1494, %v1493
        %v1505 = vpack.c.b16 %v1496, %v1495
        %v1506 = vpack.c.b16 %v1498, %v1497
        %1515 = vmatpush.bf16.msra.mxu0 %v1506
        %1516 = vmatpush.bf16.msra.mxu0 %v1505
        %1517 = vmatpush.bf16.msra.mxu0 %v1504
        %1518 = vmatpush.bf16.msra.mxu0 %v1503
        %1519 = vmatpush.bf16.msra.mxu0 %v1502
        %1520 = vmatpush.bf16.msra.mxu0 %v1501
        %1521 = vmatpush.bf16.msra.mxu0 %v1500
        %1522 = vmatpush.bf16.msra.mxu0 %v1499
        %1523 = vmatmul.bf16.gmra.mxu0 %v1330
        %v1524 = vpop.f32.mrf.mxu0
        %v1525 = vadd.f32 %v1428, %v1524
        %v1526 = vpop.f32.mrf.mxu0
        %v1527 = vadd.f32 %v1430, %v1526
        %1528 = vmatmul.bf16.gmra.mxu0 %v1331
        %v1529 = vpop.f32.mrf.mxu0
        %v1530 = vadd.f32 %v1433, %v1529
        %v1531 = vpop.f32.mrf.mxu0
        %v1532 = vadd.f32 %v1435, %v1531
        %1533 = vmatmul.bf16.gmra.mxu0 %v1332
        %v1534 = vpop.f32.mrf.mxu0
        %v1535 = vadd.f32 %v1438, %v1534
        %v1536 = vpop.f32.mrf.mxu0
        %v1537 = vadd.f32 %v1440, %v1536
        %1538 = vmatmul.bf16.gmra.mxu0 %v1333
        %v1539 = vpop.f32.mrf.mxu0
        %v1540 = vadd.f32 %v1443, %v1539
        %v1541 = vpop.f32.mrf.mxu0
        %v1542 = vadd.f32 %v1445, %v1541
        %1543 = vmatmul.bf16.gmra.mxu0 %v1334
        %v1544 = vpop.f32.mrf.mxu0
        %v1545 = vadd.f32 %v1448, %v1544
        %v1546 = vpop.f32.mrf.mxu0
        %v1547 = vadd.f32 %v1450, %v1546
        %1548 = vmatmul.bf16.gmra.mxu0 %v1335
        %v1549 = vpop.f32.mrf.mxu0
        %v1550 = vadd.f32 %v1453, %v1549
        %v1551 = vpop.f32.mrf.mxu0
        %v1552 = vadd.f32 %v1455, %v1551
        %1553 = vmatmul.bf16.gmra.mxu0 %v1336
        %v1554 = vpop.f32.mrf.mxu0
        %v1555 = vadd.f32 %v1458, %v1554
        %v1556 = vpop.f32.mrf.mxu0
        %v1557 = vadd.f32 %v1460, %v1556
        %1558 = vmatmul.bf16.gmra.mxu0 %v1337
        %v1559 = vpop.f32.mrf.mxu0
        %v1560 = vadd.f32 %v1463, %v1559
        %v1561 = vpop.f32.mrf.mxu0
        %v1562 = vadd.f32 %v1465, %v1561
        %1563 = vdwg.mxu0
        %s1564 = scalar_lea.vmem [#allocation10], 128
        %v1565 = vld [vmem:[%s1564] sm:$0xff]
        %v1566 = vld [vmem:[%s1564 + $0x8] sm:$0xff]
        %v1567 = vld [vmem:[%s1564 + $0x10] sm:$0xff]
        %v1568 = vld [vmem:[%s1564 + $0x18] sm:$0xff]
        %v1569 = vld [vmem:[%s1564 + $0x20] sm:$0xff]
        %v1570 = vld [vmem:[%s1564 + $0x28] sm:$0xff]
        %v1571 = vld [vmem:[%s1564 + $0x30] sm:$0xff]
        %v1572 = vld [vmem:[%s1564 + $0x38] sm:$0xff]
        %v1573 = vld [vmem:[%s1564 + $0x40] sm:$0xff]
        %v1574 = vld [vmem:[%s1564 + $0x48] sm:$0xff]
        %v1575 = vld [vmem:[%s1564 + $0x50] sm:$0xff]
        %v1576 = vld [vmem:[%s1564 + $0x58] sm:$0xff]
        %v1577 = vld [vmem:[%s1564 + $0x60] sm:$0xff]
        %v1578 = vld [vmem:[%s1564 + $0x68] sm:$0xff]
        %v1579 = vld [vmem:[%s1564 + $0x70] sm:$0xff]
        %v1580 = vld [vmem:[%s1564 + $0x78] sm:$0xff]
        %v1581 = vadd.f32 %v1525, %v1565
        %v1582 = vadd.f32 %v1527, %v1566
        %v1583 = vadd.f32 %v1530, %v1567
        %v1584 = vadd.f32 %v1532, %v1568
        %v1585 = vadd.f32 %v1535, %v1569
        %v1586 = vadd.f32 %v1537, %v1570
        %v1587 = vadd.f32 %v1540, %v1571
        %v1588 = vadd.f32 %v1542, %v1572
        %v1589 = vadd.f32 %v1545, %v1573
        %v1590 = vadd.f32 %v1547, %v1574
        %v1591 = vadd.f32 %v1550, %v1575
        %v1592 = vadd.f32 %v1552, %v1576
        %v1593 = vadd.f32 %v1555, %v1577
        %v1594 = vadd.f32 %v1557, %v1578
        %v1595 = vadd.f32 %v1560, %v1579
        %v1596 = vadd.f32 %v1562, %v1580
        %s1597 = scalar_lea.vmem %s368, 128 [#allocation11]
        %1598 = vst [vmem:[%s1597] sm:$0xff] %v1581
        %1599 = vst [vmem:[%s1597 + $0x8] sm:$0xff] %v1582
        %1600 = vst [vmem:[%s1597 + $0x10] sm:$0xff] %v1583
        %1601 = vst [vmem:[%s1597 + $0x18] sm:$0xff] %v1584
        %1602 = vst [vmem:[%s1597 + $0x20] sm:$0xff] %v1585
        %1603 = vst [vmem:[%s1597 + $0x28] sm:$0xff] %v1586
        %1604 = vst [vmem:[%s1597 + $0x30] sm:$0xff] %v1587
        %1605 = vst [vmem:[%s1597 + $0x38] sm:$0xff] %v1588
        %1606 = vst [vmem:[%s1597 + $0x40] sm:$0xff] %v1589
        %1607 = vst [vmem:[%s1597 + $0x48] sm:$0xff] %v1590
        %1608 = vst [vmem:[%s1597 + $0x50] sm:$0xff] %v1591
        %1609 = vst [vmem:[%s1597 + $0x58] sm:$0xff] %v1592
        %1610 = vst [vmem:[%s1597 + $0x60] sm:$0xff] %v1593
        %1611 = vst [vmem:[%s1597 + $0x68] sm:$0xff] %v1594
        %1612 = vst [vmem:[%s1597 + $0x70] sm:$0xff] %v1595
        %1613 = vst [vmem:[%s1597 + $0x78] sm:$0xff] %v1596
        %s1614 = sand.u32 %s169, 1
        %s1615 = scalar_lea.sflag [#allocation4], %s1614
        %s1616 = sand.u32 %s169, 1
        %s1617 = smul.addr %s1616, 256
        %s1618 = scalar_lea.vmem [#allocation11], %s1617
        %s1619 = sand.u32 %s195, 1
        %s1620 = scalar_lea.sflag [#allocation13], %s1619
        %s1621 = sand.u32 %s195, 1
        %s1622 = smul.addr %s1621, 16
        %s1623 = scalar_lea.vmem [#allocation12], %s1622
        // Predicated region
        $region65: #{tpu_custom_call.1} parent=43 // pred_check
          %p1624 = pneg %p179
        $region66: #{tpu_custom_call.1} parent=43 // pred_check_branch
          %1626 = sbr.rel (%p1624) target = $region68
        $region67: #{tpu_custom_call.1} parent=43 // pred_region
          %s1627 = smul.u32 32, %s30
          %1629 = vsyncadd %s1615, 0
          %s1630 = smul.addr %s1627, 8
          %s1631 = scalar_lea.hbm %s6, %s1630
          %s1632 = sshll.u32 %s1618, 4
          %s1633 = int_to_ptr.vmem [resolvable:$true] %s1632
          %s1634 = sshll.u32 %s1631, 4
          %s1635 = int_to_ptr.hbm [resolvable:$true] %s1634
          %1640 = dma.vmem_to_hbm [thread:$0]  %s1633, 4096, %s1635, %s1615, 128, 128, 8
        $region68: #{tpu_custom_call.1} parent=43 // pred_fallthru
          _
        // Predicated region
        $region69: #{tpu_custom_call.1} parent=43 // pred_check
          %p1641 = pneg %p205
        $region70: #{tpu_custom_call.1} parent=43 // pred_check_branch
          %1643 = sbr.rel (%p1641) target = $region72
        $region71: #{tpu_custom_call.1} parent=43 // pred_region
          %1645 = vsyncadd %s1620, 0
          %s1646 = smul.addr %s30, 2
          %s1647 = smul.addr %s1646, 8
          %s1648 = scalar_lea.hbm %s7, %s1647
          %s1649 = sshll.u32 %s1623, 4
          %s1650 = int_to_ptr.vmem [resolvable:$true] %s1649
          %s1651 = sshll.u32 %s1648, 4
          %s1652 = int_to_ptr.hbm [resolvable:$true] %s1651
          %1657 = dma.vmem_to_hbm [thread:$0]  %s1650, 256, %s1652, %s1620, 128, 128, 8
        $region72: #{tpu_custom_call.1} parent=43 // pred_fallthru
          _
      $region44: #{tpu_custom_call.1} parent=5 // pred_fallthru
        _
      %p1658 = scmp.le.s32.totalorder 2, %s25
      // Predicated region
      $region73: #{tpu_custom_call.1} parent=5 // pred_check
        %p1659 = pneg %p1658
      $region74: #{tpu_custom_call.1} parent=5 // pred_check_branch
        %1661 = sbr.rel (%p1659) target = $region76
      $region75: #{tpu_custom_call.1} parent=5 // pred_region
        %s1662 = ssub.s32 %s25, 2
        // Predicated region
        $region77: #{tpu_custom_call.1} parent=75 // pred_check
          %p1663 = pneg %p185
        $region78: #{tpu_custom_call.1} parent=75 // pred_check_branch
          %1665 = sbr.rel (%p1663) target = $region80
        $region79: #{tpu_custom_call.1} parent=75 // pred_region
          %s1666 = sand.u32 %s170, 1
          %s1667 = scalar_lea.sflag [#allocation4], %s1666
          %s1668 = sand.u32 %s170, 1
          %s1669 = smul.addr %s1668, 256
          %s1670 = scalar_lea.vmem [#allocation11], %s1669
          %1672 = dma.done %s1667, 4096
        $region80: #{tpu_custom_call.1} parent=75 // pred_fallthru
          _
        // Predicated region
        $region81: #{tpu_custom_call.1} parent=75 // pred_check
          %p1673 = pneg %p211
        $region82: #{tpu_custom_call.1} parent=75 // pred_check_branch
          %1675 = sbr.rel (%p1673) target = $region84
        $region83: #{tpu_custom_call.1} parent=75 // pred_region
          %s1676 = sand.u32 %s196, 1
          %s1677 = scalar_lea.sflag [#allocation13], %s1676
          %s1678 = sand.u32 %s196, 1
          %s1679 = smul.addr %s1678, 16
          %s1680 = scalar_lea.vmem [#allocation12], %s1679
          %1682 = dma.done %s1677, 256
        $region84: #{tpu_custom_call.1} parent=75 // pred_fallthru
          _
      $region76: #{tpu_custom_call.1} parent=5 // pred_fallthru
        _
    $region6: #{tpu_custom_call.1} parent=1 // loop_footer
      %s29 = sadd.s32 1, %s25
    $region7: #{tpu_custom_call.1} parent=1 // loop_footer_branch
      %24 = sbr.rel target = $region3
    $region8: #{tpu_custom_call.1} parent=1 // loop_exit
      _
    %1683 = vsyncpa [#allocation3], 1
    %s1684 = scalar_lea.sflag [#allocation3], 1
    %1685 = vsyncpa %s1684, 1
    %1686 = vsyncpa [#allocation6], 1
    %1687 = vsyncpa [#allocation9], 1
    %1688 = vsyncpa [#allocation4], 1
    %s1689 = scalar_lea.sflag [#allocation4], 1
    %1690 = vsyncpa %s1689, 1
    %1691 = vsyncpa [#allocation13], 1
    %s1692 = scalar_lea.sflag [#allocation13], 1
    %1693 = vsyncpa %s1692, 1

</llo_original>
